<compile_context>
chip_gen: v6e
topology: v6e:2x2x1
jax: 0.10.0
libtpu: 0.0.40
codegen_flags: <defaults>
</compile_context>

<pallas_src>
import functools

import jax
import jax.numpy as jnp
from jax.experimental import pallas as pl
from jax.experimental.pallas import tpu as pltpu

BN_EPS = 1e-5


# ---------------------------------------------------------------------------
# Kernel: fused (nearest x2 upsample -> 3x3 conv) per halo row-tile
#         + per-tile BatchNorm partial statistics.
# ---------------------------------------------------------------------------
def _conv_stats_kernel(x_ref, w_ref, y_ref, st_ref, *, mxu_dtype):
    """x_ref : (Cin, TR+2, W+2)   zero-padded CHW halo window (original res)
       w_ref : (4*Cout, 9*Cin)    fused weights; rows=(parity_y,parity_x,co),
                                  cols=(tap_u,tap_v,ci)
       y_ref : (4*Cout, TR*W)     transposed conv result (lane dim = TR*W)
       st_ref: (4*Cout, 2)        per-row [sum, centered M2] over TR*W elems
    """
    cin, trp2, wp2 = x_ref.shape
    tr, w = trp2 - 2, wp2 - 2
    trw = tr * w

    xt = x_ref[...].astype(jnp.float32)                     # (Cin, TR+2, W+2)

    # Shared 3x3 im2col, built directly in transposed (K, M) orientation so
    # the MXU result is already lane-dense and needs no repack before storing.
    taps = []
    for u in range(3):
        for v in range(3):
            taps.append(xt[:, u:u + tr, v:v + w].reshape(cin, trw))
    patch_t = jnp.concatenate(taps, axis=0)                 # (9*Cin, TR*W)

    p = jnp.dot(w_ref[...].astype(mxu_dtype), patch_t.astype(mxu_dtype),
                preferred_element_type=jnp.float32)         # (4*Cout, TR*W)
    y_ref[...] = p.astype(y_ref.dtype)

    # BN partials while the tile is in registers (f32 lane reduces).
    # Centered M2 (not a raw sum of squares) so the wrapper's Chan-style
    # combine has no E[x^2]-E[x]^2 catastrophic cancellation.
    s = jnp.sum(p, axis=1, keepdims=True)                   # (4*Cout, 1)
    mu = s * (1.0 / trw)
    d = p - mu
    m2 = jnp.sum(d * d, axis=1, keepdims=True)              # (4*Cout, 1)
    st_ref[...] = jnp.concatenate([s, m2], axis=1)          # (4*Cout, 2)


# ---------------------------------------------------------------------------
# Row-tile selection: largest TR whose double-buffered blocks fit the budget.
# ---------------------------------------------------------------------------
def _pick_row_tile(H, W, Cin, Cout, vmem_budget_bytes=None):
    if vmem_budget_bytes is None:
        try:
            vmem_budget_bytes = pltpu.get_tpu_info().vmem_capacity_bytes // 4
        except Exception:
            vmem_budget_bytes = 16 * 1024 * 1024
    # TR must divide H and keep the output block's lane dim (TR*W) a multiple
    # of 128 (or cover the full H*W) so stores stay unmasked.
    cands = [tr for tr in range(1, H + 1)
             if H % tr == 0 and (tr == H or (tr * W) % 128 == 0)]

    def per_step_bytes(tr):
        x_blk = Cin * (tr + 2) * (W + 2) * 4
        y_blk = 4 * Cout * tr * W * 4
        st_blk = 4 * Cout * 2 * 4
        return 2 * (x_blk + y_blk + st_blk)    # x2: BlockSpec double-buffers

    fitting = [tr for tr in cands if per_step_bytes(tr) <= vmem_budget_bytes]
    return max(fitting) if fitting else min(cands)


# ---------------------------------------------------------------------------
# Wrapper
# ---------------------------------------------------------------------------
def decoder_block(x_nchw, weight_oihw, gamma, beta, *,
                  row_tile=None, mxu_dtype=jnp.float32, vmem_budget_bytes=None):
    """Forward pass of DecoderBlock. x_nchw: (N, Cin, H, W) float32.
    Returns (N, Cout, 2H, 2W) float32."""
    N, Cin, H, W = x_nchw.shape
    Cout = weight_oihw.shape[0]
    H2, W2 = 2 * H, 2 * W

    TR = row_tile if row_tile is not None else _pick_row_tile(
        H, W, Cin, Cout, vmem_budget_bytes)
    if H % TR != 0 or not (TR == H or (TR * W) % 128 == 0):
        raise ValueError(f"row_tile={TR} must divide H={H} and keep TR*W a "
                         f"multiple of 128 (or TR == H)")
    num_tiles = H // TR

    # --- fused upsample+conv weights: all 4 parities folded into the output
    # dim of one shared 3x3 tap grid -----------------------------------------
    wf = weight_oihw.astype(jnp.float32)                  # (Cout, Cin, 3, 3)
    # R[parity, a, ky]: which conv taps ky hit original-res offset a for a
    # given output parity (nearest x2 upsample composed with pad-1 3x3 conv).
    R = jnp.array([[[1., 0., 0.], [0., 1., 1.]],
                   [[1., 1., 0.], [0., 0., 1.]]], jnp.float32)
    weff = jnp.einsum('yak,xbl,oikl->yxabio', R, R, wf)   # (2,2,2,2,Cin,Cout)
    w3 = jnp.zeros((2, 2, 3, 3, Cin, Cout), jnp.float32)  # (dy,dx,u,v,ci,co)
    for dy in range(2):
        for dx in range(2):
            w3 = w3.at[dy, dx, dy:dy + 2, dx:dx + 2].set(weff[dy, dx])
    # rows = (dy, dx, co), cols = (u, v, ci) -> matches kernel patch ordering.
    w_t = jnp.transpose(w3, (0, 1, 5, 2, 3, 4)).reshape(4 * Cout, 9 * Cin)

    # --- halo row windows: bounded per-step VMEM, auto double-buffered ------
    x_pad = jnp.pad(x_nchw.astype(jnp.float32),
                    ((0, 0), (0, 0), (1, 1), (1, 1)))     # (N, Cin, H+2, W+2)
    x_tiles = jnp.stack(
        [x_pad[:, :, t * TR:t * TR + TR + 2, :] for t in range(num_tiles)],
        axis=1)                                # (N, num_tiles, Cin, TR+2, W+2)
    # TODO(synk): for very large inputs, replace this wrapper-side halo copy
    # with memory_space=pl.ANY + in-kernel make_async_copy of the (TR+2)-row
    # window to avoid the extra HBM pass over the input.

    kernel = functools.partial(_conv_stats_kernel, mxu_dtype=mxu_dtype)
    yconv, stats = pl.pallas_call(
        kernel,
        out_shape=(
            jax.ShapeDtypeStruct((N, 4 * Cout, H * W), jnp.float32),
            jax.ShapeDtypeStruct((N, num_tiles, 4 * Cout, 2), jnp.float32),
        ),
        grid=(N, num_tiles),
        in_specs=[
            pl.BlockSpec((None, None, Cin, TR + 2, W + 2),
                         lambda n, t: (n, t, 0, 0, 0)),
            pl.BlockSpec((4 * Cout, 9 * Cin), lambda n, t: (0, 0)),
        ],
        out_specs=(
            pl.BlockSpec((None, 4 * Cout, TR * W), lambda n, t: (n, 0, t)),
            pl.BlockSpec((None, None, 4 * Cout, 2), lambda n, t: (n, t, 0, 0)),
        ),
        compiler_params=pltpu.CompilerParams(
            dimension_semantics=("parallel", "parallel")),
    )(x_tiles, w_t)

    # --- tiny Chan-style combine of per-tile partials -> fold BN into one
    # (scale, bias) pair ------------------------------------------------------
    cnt = TR * W                               # elements per (n, tile, parity)
    G = N * num_tiles * 4                      # groups per output channel
    s = stats[..., 0].reshape(G, Cout)
    m2 = stats[..., 1].reshape(G, Cout)
    mean_g = s / cnt
    mean = jnp.sum(s, axis=0) / (G * cnt)
    var = (jnp.sum(m2, axis=0)
           + cnt * jnp.sum((mean_g - mean) ** 2, axis=0)) / (G * cnt)
    var = jnp.maximum(var, 0.0)                # biased variance (train mode)
    inv = jax.lax.rsqrt(var + BN_EPS)
    scale = gamma.astype(jnp.float32) * inv
    bias = beta.astype(jnp.float32) - mean * scale
    # TODO(synk): running_mean / running_var momentum buffer updates are not
    # produced; only the train-mode batch-stat forward normalization is done.

    # --- epilogue: scale*x+bias -> ReLU, fused by XLA into the parity
    # un-shuffle transpose (no second Pallas pass / extra HBM round trip) -----
    y = yconv.reshape(N, 2, 2, Cout, H, W)                 # (n, dy, dx, co, i, j)
    y = jnp.maximum(y * scale.reshape(1, 1, 1, Cout, 1, 1)
                    + bias.reshape(1, 1, 1, Cout, 1, 1), 0.0)
    out = jnp.transpose(y, (0, 3, 4, 1, 5, 2)).reshape(N, Cout, H2, W2)
    return out


# ---------------------------------------------------------------------------
# Pure-JAX reference (mirrors the PyTorch module) for a correctness check.
# ---------------------------------------------------------------------------
def _reference(x_nchw, weight_oihw, gamma, beta):
    xu = jnp.repeat(jnp.repeat(x_nchw, 2, axis=2), 2, axis=3)   # nearest x2
    y = jax.lax.conv_general_dilated(
        xu, weight_oihw, window_strides=(1, 1), padding=((1, 1), (1, 1)),
        dimension_numbers=("NCHW", "OIHW", "NCHW"),
        precision=jax.lax.Precision.HIGHEST)
    mean = jnp.mean(y, axis=(0, 2, 3), keepdims=True)
    var = jnp.mean((y - mean) ** 2, axis=(0, 2, 3), keepdims=True)
    yn = (y - mean) * jax.lax.rsqrt(var + BN_EPS)
    yn = yn * gamma.reshape(1, -1, 1, 1) + beta.reshape(1, -1, 1, 1)
    return jnp.maximum(yn, 0.0)


if __name__ == "__main__":
    key = jax.random.PRNGKey(0)
    k_x, k_w, k_g, k_b = jax.random.split(key, 4)

    N, Cin, Cout, H, W = 2, 4, 8, 16, 16

    x = jax.random.normal(k_x, (N, Cin, H, W), dtype=jnp.float32)
    # Conv2d(Cin, Cout, 3, padding=1, bias=False) weight: (Cout, Cin, 3, 3)
    weight = jax.random.normal(k_w, (Cout, Cin, 3, 3), dtype=jnp.float32) * 0.1
    # BatchNorm2d affine params (deterministic, non-trivial)
    gamma = 1.0 + 0.1 * jax.random.normal(k_g, (Cout,), dtype=jnp.float32)
    beta = 0.1 * jax.random.normal(k_b, (Cout,), dtype=jnp.float32)

    ref = _reference(x, weight, gamma, beta)

    fwd = jax.jit(decoder_block,
                  static_argnames=("row_tile", "mxu_dtype", "vmem_budget_bytes"))

    # Default: VMEM-budget-driven row tile (whole image at this toy shape).
    out = fwd(x, weight, gamma, beta)
    jax.block_until_ready(out)
    assert out.shape == (N, Cout, 2 * H, 2 * W)
    assert bool(jnp.all(out >= 0.0))                    # ReLU output is >= 0
    err = float(jnp.max(jnp.abs(out - ref)))
    assert bool(jnp.allclose(out, ref, atol=1e-2, rtol=1e-2)), err

    # Also exercise the multi-tile (halo) path explicitly.
    out8 = fwd(x, weight, gamma, beta, row_tile=8)
    jax.block_until_ready(out8)
    err8 = float(jnp.max(jnp.abs(out8 - ref)))
    assert bool(jnp.allclose(out8, ref, atol=1e-2, rtol=1e-2)), err8

    print("KERNEL_OK")
</pallas_src>

<mosaic_0001>
module attributes {stable_mosaic.version = 11 : i64} {
  func.func @_conv_stats_kernel(%arg0: i32, %arg1: i32, %arg2: memref<1x1x4x18x18xf32, #tpu.memory_space<vmem>>, %arg3: memref<32x36xf32, #tpu.memory_space<vmem>>, %arg4: memref<1x32x256xf32, #tpu.memory_space<vmem>>, %arg5: memref<1x1x32x2xf32, #tpu.memory_space<vmem>>) attributes {dimension_semantics = [#tpu.dimension_semantics<parallel>, #tpu.dimension_semantics<parallel>], iteration_bounds = array<i64: 2, 1>, scalar_prefetch = 0 : i64, scratch_operands = 0 : i64, tpu.core_type = #tpu.core_type<tc>, window_params = [{transform_indices = @transform_0, window_bounds = array<i64: 1, 1, 4, 18, 18>}, {pipeline_mode = #tpu.pipeline_mode<synchronous>, transform_indices = @transform_1, window_bounds = array<i64: 32, 36>}, {transform_indices = @transform_2, window_bounds = array<i64: 1, 32, 256>}, {transform_indices = @transform_3, window_bounds = array<i64: 1, 1, 32, 2>}]} {
    %c0 = arith.constant 0 : index
    %c0_0 = arith.constant 0 : index
    %c0_1 = arith.constant 0 : index
    %c0_2 = arith.constant 0 : index
    %c0_3 = arith.constant 0 : index
    %0 = vector.load %arg2[%c0, %c0_0, %c0_1, %c0_2, %c0_3] : memref<1x1x4x18x18xf32, #tpu.memory_space<vmem>>, vector<1x1x4x18x18xf32>
    %1 = vector.shape_cast %0 : vector<1x1x4x18x18xf32> to vector<4x18x18xf32>
    %2 = vector.extract_strided_slice %1 {offsets = [0, 0, 0], sizes = [4, 16, 16], strides = [1, 1, 1]} : vector<4x18x18xf32> to vector<4x16x16xf32>
    %3 = vector.shape_cast %2 : vector<4x16x16xf32> to vector<4x256xf32>
    %4 = vector.extract_strided_slice %1 {offsets = [0, 0, 1], sizes = [4, 16, 16], strides = [1, 1, 1]} : vector<4x18x18xf32> to vector<4x16x16xf32>
    %5 = vector.shape_cast %4 : vector<4x16x16xf32> to vector<4x256xf32>
    %6 = vector.extract_strided_slice %1 {offsets = [0, 0, 2], sizes = [4, 16, 16], strides = [1, 1, 1]} : vector<4x18x18xf32> to vector<4x16x16xf32>
    %7 = vector.shape_cast %6 : vector<4x16x16xf32> to vector<4x256xf32>
    %8 = vector.extract_strided_slice %1 {offsets = [0, 1, 0], sizes = [4, 16, 16], strides = [1, 1, 1]} : vector<4x18x18xf32> to vector<4x16x16xf32>
    %9 = vector.shape_cast %8 : vector<4x16x16xf32> to vector<4x256xf32>
    %10 = vector.extract_strided_slice %1 {offsets = [0, 1, 1], sizes = [4, 16, 16], strides = [1, 1, 1]} : vector<4x18x18xf32> to vector<4x16x16xf32>
    %11 = vector.shape_cast %10 : vector<4x16x16xf32> to vector<4x256xf32>
    %12 = vector.extract_strided_slice %1 {offsets = [0, 1, 2], sizes = [4, 16, 16], strides = [1, 1, 1]} : vector<4x18x18xf32> to vector<4x16x16xf32>
    %13 = vector.shape_cast %12 : vector<4x16x16xf32> to vector<4x256xf32>
    %14 = vector.extract_strided_slice %1 {offsets = [0, 2, 0], sizes = [4, 16, 16], strides = [1, 1, 1]} : vector<4x18x18xf32> to vector<4x16x16xf32>
    %15 = vector.shape_cast %14 : vector<4x16x16xf32> to vector<4x256xf32>
    %16 = vector.extract_strided_slice %1 {offsets = [0, 2, 1], sizes = [4, 16, 16], strides = [1, 1, 1]} : vector<4x18x18xf32> to vector<4x16x16xf32>
    %17 = vector.shape_cast %16 : vector<4x16x16xf32> to vector<4x256xf32>
    %18 = vector.extract_strided_slice %1 {offsets = [0, 2, 2], sizes = [4, 16, 16], strides = [1, 1, 1]} : vector<4x18x18xf32> to vector<4x16x16xf32>
    %19 = vector.shape_cast %18 : vector<4x16x16xf32> to vector<4x256xf32>
    %20 = tpu.concatenate %3, %5, %7, %9, %11, %13, %15, %17, %19 in 0 : vector<4x256xf32>, vector<4x256xf32>, vector<4x256xf32>, vector<4x256xf32>, vector<4x256xf32>, vector<4x256xf32>, vector<4x256xf32>, vector<4x256xf32>, vector<4x256xf32> -> vector<36x256xf32>
    %c0_4 = arith.constant 0 : index
    %c0_5 = arith.constant 0 : index
    %21 = vector.load %arg3[%c0_4, %c0_5] : memref<32x36xf32, #tpu.memory_space<vmem>>, vector<32x36xf32>
    %cst = arith.constant dense<0.000000e+00> : vector<32x256xf32>
    %22 = tpu.matmul %21, %20, %cst {dimension_numbers = #tpu.dot_dimension_numbers<[1], [0], [0], [1], [0, 0, 1, 1], [], []>} : vector<32x36xf32>, vector<36x256xf32>, vector<32x256xf32> -> vector<32x256xf32>
    %c0_6 = arith.constant 0 : index
    %c0_7 = arith.constant 0 : index
    %c0_8 = arith.constant 0 : index
    %23 = vector.load %arg4[%c0_6, %c0_7, %c0_8] : memref<1x32x256xf32, #tpu.memory_space<vmem>>, vector<1x32x256xf32>
    %24 = vector.shape_cast %23 : vector<1x32x256xf32> to vector<32x256xf32>
    %25 = vector.shape_cast %22 : vector<32x256xf32> to vector<1x32x256xf32>
    tpu.vector_store %arg4[%c0_6, %c0_7, %c0_8], %25 {strides = array<i32>} : memref<1x32x256xf32, #tpu.memory_space<vmem>>, vector<1x32x256xf32>,
    %cst_9 = arith.constant dense<0.000000e+00> : vector<32xf32>
    %26 = vector.multi_reduction <add>, %22, %cst_9 [1] : vector<32x256xf32> to vector<32xf32>
    %27 = vector.shape_cast %26 : vector<32xf32> to vector<32x1xf32>
    %cst_10 = arith.constant 3.906250e-03 : f32
    %28 = vector.broadcast %cst_10 : f32 to vector<32x1xf32>
    %29 = arith.mulf %27, %28 : vector<32x1xf32>
    %30 = vector.broadcast %29 : vector<32x1xf32> to vector<32x256xf32>
    %31 = arith.subf %22, %30 : vector<32x256xf32>
    %32 = arith.mulf %31, %31 : vector<32x256xf32>
    %cst_11 = arith.constant dense<0.000000e+00> : vector<32xf32>
    %33 = vector.multi_reduction <add>, %32, %cst_11 [1] : vector<32x256xf32> to vector<32xf32>
    %34 = vector.shape_cast %33 : vector<32xf32> to vector<32x1xf32>
    %35 = tpu.concatenate %27, %34 in 1 : vector<32x1xf32>, vector<32x1xf32> -> vector<32x2xf32>
    %c0_12 = arith.constant 0 : index
    %c0_13 = arith.constant 0 : index
    %c0_14 = arith.constant 0 : index
    %c0_15 = arith.constant 0 : index
    %36 = vector.load %arg5[%c0_12, %c0_13, %c0_14, %c0_15] : memref<1x1x32x2xf32, #tpu.memory_space<vmem>>, vector<1x1x32x2xf32>
    %37 = vector.shape_cast %36 : vector<1x1x32x2xf32> to vector<32x2xf32>
    %38 = vector.shape_cast %35 : vector<32x2xf32> to vector<1x1x32x2xf32>
    tpu.vector_store %arg5[%c0_12, %c0_13, %c0_14, %c0_15], %38 {strides = array<i32>} : memref<1x1x32x2xf32, #tpu.memory_space<vmem>>, vector<1x1x32x2xf32>,
    return
  }
  func.func @transform_0(%arg0: i32, %arg1: i32) -> (i32, i32, i32, i32, i32) {
    %c0_i32 = arith.constant 0 : i32
    %c0_i32_0 = arith.constant 0 : i32
    %c0_i32_1 = arith.constant 0 : i32
    %c0_i32_2 = arith.constant 0 : i32
    return %arg0, %arg1, %c0_i32, %c0_i32_0, %c0_i32_1 : i32, i32, i32, i32, i32
  }
  func.func @transform_1(%arg0: i32, %arg1: i32) -> (i32, i32) {
    %c0_i32 = arith.constant 0 : i32
    %c0_i32_0 = arith.constant 0 : i32
    %c0_i32_1 = arith.constant 0 : i32
    return %c0_i32, %c0_i32_0 : i32, i32
  }
  func.func @transform_2(%arg0: i32, %arg1: i32) -> (i32, i32, i32) {
    %c0_i32 = arith.constant 0 : i32
    %c0_i32_0 = arith.constant 0 : i32
    return %arg0, %c0_i32, %arg1 : i32, i32, i32
  }
  func.func @transform_3(%arg0: i32, %arg1: i32) -> (i32, i32, i32, i32) {
    %c0_i32 = arith.constant 0 : i32
    %c0_i32_0 = arith.constant 0 : i32
    %c0_i32_1 = arith.constant 0 : i32
    return %arg0, %arg1, %c0_i32, %c0_i32_0 : i32, i32, i32, i32
  }
}

</mosaic_0001>

<llo_original>
// kernel: squeeze.10
$region0: #{squeeze.10}
  %s0 = inlined_call_operand.vmem [shape: f32[2,32], index: 0, kind: input, shape index: {}]
  %s1 = inlined_call_operand.vmem [shape: f32[8,8], index: 1, kind: output, shape index: {}]
  $region1: #{squeeze.10} parent=0
    #allocation0 [shape = 'u8[4096]{0}', space=vmem, size = 0x1000, scoped, tag = 'scoped mem for input reshape']
    %s3 = sshll.u32 1, 2
    %s4 = ssub.s32 %s3, 1
    %v5 = vld [vmem:[%s0] sm:%s4]
    %6 = vst [vmem:[#allocation0] sm:%s4] %v5
    %v7 = vld [vmem:[#allocation0] sm:$0x3]
    %vm8 = vcmask 64512
    %9 = vst.msk [vmem:[%s1] ss:$4 sm:$0x3] %vm8, %v7
    %v10 = vld [vmem:[#allocation0] sm:$0x3]
    %11 = vrot.lane.b32.xlu0 %v10, 120
    %v12 = vpop.permute.xlu0 %11
    %vm13 = vcmask 64512
    %s14 = scalar_lea.vmem %s1, 1
    %15 = vst.msk [vmem:[%s14] ss:$4 sm:$0x3] %vm13, %v12
    %v16 = vld [vmem:[#allocation0] sm:$0x3]
    %17 = vrot.lane.b32.xlu0 %v16, 112
    %v18 = vpop.permute.xlu0 %17
    %vm19 = vcmask 64512
    %s20 = scalar_lea.vmem %s1, 2
    %21 = vst.msk [vmem:[%s20] ss:$4 sm:$0x3] %vm19, %v18
    %v22 = vld [vmem:[#allocation0] sm:$0x3]
    %23 = vrot.lane.b32.xlu0 %v22, 104
    %v24 = vpop.permute.xlu0 %23
    %vm25 = vcmask 64512
    %s26 = scalar_lea.vmem %s1, 3
    %27 = vst.msk [vmem:[%s26] ss:$4 sm:$0x3] %vm25, %v24

// kernel: decoder_block.1
$region0: #{decoder_block.1}
  #allocation0 [shape = 'u32[]', space=smem, size = 0x4, offset = 0x4, fixed_abs, tag = 'smem constant byte address 0x4 - core index']
  #allocation1 [shape = 'u32[144,128]{1,0:T(1,128)}', space=vmem, size = 0x12000, scoped, tag = 'internal scratch']
  %s0 = inlined_call_operand.vmem [shape: f32[2,1,4,18,18], index: 0, kind: input, shape index: {}]
  %s1 = inlined_call_operand.vmem [shape: f32[32,36], index: 1, kind: input, shape index: {}]
  %s2 = inlined_call_operand.vmem [shape: f32[2,32,256], index: 2, kind: output, shape index: {0}]
  %s3 = inlined_call_operand.vmem [shape: f32[2,1,32,2], index: 3, kind: output, shape index: {1}]
  %4 = xla_tuple %s2, %s3
  %s5 = sld [smem:[#allocation0]]
  $region49: #{decoder_block.1} parent=0
    _
  %s7 = ssub.s32 1, %s5
  %s8 = scalar_select 0, %s7, %s5
  loop: start=0, step=1, limit=4
  $region2: #{decoder_block.1} parent=0 // loop_pre_header
    _
  $region3: #{decoder_block.1} parent=0 // loop_header
    %s10 = sphi 0, %s14
    %p11 = scmp.ge.s32.totalorder %s10, 4
    %s17 = sphi 0, %s29
    %s18 = sphi 0, %s25
    %s19 = sphi 0, %s17
    %s20 = sphi 0, %s18
    %s21 = sphi 0, %s19
    %s22 = sphi 0, %s20
    %s34 = sphi 0, %s36
    %s37 = sphi 0, %s34
    %s38 = sphi 0, %s37
    %s54 = sphi 0, %s38
    %s58 = sphi 0, %s58
    %s60 = sphi 0, %s58
    %s61 = sphi 0, %s60
    %s75 = sphi 0, %s61
    %s83 = sphi 0, %s85
    %s86 = sphi 0, %s83
    %s87 = sphi 0, %s86
    %s103 = sphi 0, %s87
    %s111 = sphi 0, %s113
    %s114 = sphi 0, %s111
    %s115 = sphi 0, %s114
    %s131 = sphi 0, %s115
  $region4: #{decoder_block.1} parent=0 // loop_header_branch
    %13 = sbr.rel (%p11) target = $region8
  $region5: #{decoder_block.1} parent=0 // loop_body
    %s15 = ssub.s32 %s10, 1
    %s16 = ssub.s32 %s10, 2
    %s23 = sadd.s32 1, %s18
    %p24 = scmp.ge.s32.totalorder %s23, 1
    %s25 = scalar_select %p24, 0, %s23
    %s26 = sadd.s32 1, %s17
    %s27 = scalar_select %p24, %s26, %s17
    %p28 = scmp.ge.s32.totalorder %s27, 2
    %s29 = scalar_select %p28, 0, %s27
    %s30 = ssub.s32 %s17, %s29
    %s31 = ssub.s32 %s18, %s25
    %s32 = sor.u32 %s30, %s31
    %p33 = scmp.eq.s32.totalorder %s32, 0
    %s35 = sadd.s32 %s34, 1
    %s36 = scalar_select %p33, %s34, %s35
    %p39 = pneg %p33
    %p40 = scmp.eq.s32.totalorder %s10, 1
    %p41 = por %p39, %p40
    %p42 = scmp.ne.s32.totalorder %s34, %s37
    %p43 = scmp.eq.s32.totalorder %s10, 0
    %p44 = por %p42, %p43
    %p45 = scmp.ne.s32.totalorder %s34, %s37
    %p46 = scmp.eq.s32.totalorder %s15, 1
    %p47 = por %p45, %p46
    %p48 = scmp.ne.s32.totalorder %s37, %s38
    %p49 = scmp.eq.s32.totalorder %s15, 0
    %p50 = por %p48, %p49
    %p51 = scmp.ne.s32.totalorder %s37, %s38
    %p52 = scmp.eq.s32.totalorder %s16, 1
    %p53 = por %p51, %p52
    %p55 = scmp.ne.s32.totalorder %s38, %s54
    %p56 = scmp.eq.s32.totalorder %s16, 0
    %p57 = por %p55, %p56
    %s59 = sadd.s32 %s58, 1
    %p62 = scmp.eq.s32.totalorder %s10, 1
    %p63 = scmp.ne.s32.totalorder %s58, %s60
    %p64 = scmp.eq.s32.totalorder %s10, 0
    %p65 = por %p63, %p64
    %p66 = scmp.ne.s32.totalorder %s58, %s60
    %p67 = scmp.eq.s32.totalorder %s15, 1
    %p68 = por %p66, %p67
    %p69 = scmp.ne.s32.totalorder %s60, %s61
    %p70 = scmp.eq.s32.totalorder %s15, 0
    %p71 = por %p69, %p70
    %p72 = scmp.ne.s32.totalorder %s60, %s61
    %p73 = scmp.eq.s32.totalorder %s16, 1
    %p74 = por %p72, %p73
    %p76 = scmp.ne.s32.totalorder %s61, %s75
    %p77 = scmp.eq.s32.totalorder %s16, 0
    %p78 = por %p76, %p77
    %s79 = ssub.s32 %s17, %s29
    %s80 = ssub.s32 %s18, %s25
    %s81 = sor.u32 %s79, %s80
    %p82 = scmp.eq.s32.totalorder %s81, 0
    %s84 = sadd.s32 %s83, 1
    %s85 = scalar_select %p82, %s83, %s84
    %p88 = pneg %p82
    %p89 = scmp.eq.s32.totalorder %s10, 1
    %p90 = por %p88, %p89
    %p91 = scmp.ne.s32.totalorder %s83, %s86
    %p92 = scmp.eq.s32.totalorder %s10, 0
    %p93 = por %p91, %p92
    %p94 = scmp.ne.s32.totalorder %s83, %s86
    %p95 = scmp.eq.s32.totalorder %s15, 1
    %p96 = por %p94, %p95
    %p97 = scmp.ne.s32.totalorder %s86, %s87
    %p98 = scmp.eq.s32.totalorder %s15, 0
    %p99 = por %p97, %p98
    %p100 = scmp.ne.s32.totalorder %s86, %s87
    %p101 = scmp.eq.s32.totalorder %s16, 1
    %p102 = por %p100, %p101
    %p104 = scmp.ne.s32.totalorder %s87, %s103
    %p105 = scmp.eq.s32.totalorder %s16, 0
    %p106 = por %p104, %p105
    %s107 = ssub.s32 %s17, %s29
    %s108 = ssub.s32 %s18, %s25
    %s109 = sor.u32 %s107, %s108
    %p110 = scmp.eq.s32.totalorder %s109, 0
    %s112 = sadd.s32 %s111, 1
    %s113 = scalar_select %p110, %s111, %s112
    %p116 = pneg %p110
    %p117 = scmp.eq.s32.totalorder %s10, 1
    %p118 = por %p116, %p117
    %p119 = scmp.ne.s32.totalorder %s111, %s114
    %p120 = scmp.eq.s32.totalorder %s10, 0
    %p121 = por %p119, %p120
    %p122 = scmp.ne.s32.totalorder %s111, %s114
    %p123 = scmp.eq.s32.totalorder %s15, 1
    %p124 = por %p122, %p123
    %p125 = scmp.ne.s32.totalorder %s114, %s115
    %p126 = scmp.eq.s32.totalorder %s15, 0
    %p127 = por %p125, %p126
    %p128 = scmp.ne.s32.totalorder %s114, %s115
    %p129 = scmp.eq.s32.totalorder %s16, 1
    %p130 = por %p128, %p129
    %p132 = scmp.ne.s32.totalorder %s115, %s131
    %p133 = scmp.eq.s32.totalorder %s16, 0
    %p134 = por %p132, %p133
    %p135 = scmp.le.s32.totalorder 1, %s10
    %p136 = scmp.lt.s32.totalorder %s10, 3
    %p137 = pnand %p135, %p136
    %p138 = pneg %p137
    // Predicated region
    $region9: #{decoder_block.1} parent=5 // pred_check
      _
    $region10: #{decoder_block.1} parent=5 // pred_check_branch
      %140 = sbr.rel (%p137) target = $region12
    $region11: #{decoder_block.1} parent=5 // pred_region
      %s141 = ssub.s32 %s10, 1
      // Predicated region
      $region13: #{decoder_block.1} parent=11 // pred_check
        %p142 = pneg %p71
      $region14: #{decoder_block.1} parent=11 // pred_check_branch
        %144 = sbr.rel (%p142) target = $region16
      $region15: #{decoder_block.1} parent=11 // pred_region
        _
      $region16: #{decoder_block.1} parent=11 // pred_fallthru
        _
    $region12: #{decoder_block.1} parent=5 // pred_fallthru
      _
    %p145 = scmp.lt.s32.totalorder %s10, 2
    // Predicated region
    $region17: #{decoder_block.1} parent=5 // pred_check
      %p146 = pneg %p145
    $region18: #{decoder_block.1} parent=5 // pred_check_branch
      %148 = sbr.rel (%p146) target = $region20
    $region19: #{decoder_block.1} parent=5 // pred_region
      // Predicated region
      $region21: #{decoder_block.1} parent=19 // pred_check
        %p149 = pneg %p44
      $region22: #{decoder_block.1} parent=19 // pred_check_branch
        %151 = sbr.rel (%p149) target = $region24
      $region23: #{decoder_block.1} parent=19 // pred_region
        %p152 = scmp.lt.s32.totalorder %s17, 1
        %s153 = scalar_select %p152, %s17, 1
        %p154 = scmp.lt.s32.totalorder %s18, 0
        %s155 = scalar_select %p154, %s18, 0
        %s156 = smul.addr %s155, 12
        %s157 = smul.addr %s153, 12
        %s158 = sadd.s32 %s156, %s157
        %s159 = smul.addr %s158, 8
        %s160 = scalar_lea.vmem %s0, %s159
      $region24: #{decoder_block.1} parent=19 // pred_fallthru
        _
    $region20: #{decoder_block.1} parent=5 // pred_fallthru
      _
    %p161 = scmp.le.s32.totalorder 1, %s10
    %p162 = scmp.lt.s32.totalorder %s10, 3
    %p163 = pnand %p161, %p162
    %p164 = pneg %p163
    // Predicated region
    $region25: #{decoder_block.1} parent=5 // pred_check
      _
    $region26: #{decoder_block.1} parent=5 // pred_check_branch
      %166 = sbr.rel (%p163) target = $region28
    $region27: #{decoder_block.1} parent=5 // pred_region
      %s167 = ssub.s32 %s10, 1
      %p168 = scmp.lt.s32.totalorder %s19, 1
      %s169 = scalar_select %p168, %s19, 1
      %p170 = scmp.lt.s32.totalorder %s20, 0
      %s171 = scalar_select %p170, %s20, 0
      %s172 = smul.addr %s171, 12
      %s173 = smul.addr %s169, 12
      %s174 = sadd.s32 %s172, %s173
      %s175 = smul.addr %s174, 8
      %s176 = scalar_lea.vmem %s0, %s175
      %p177 = pneg %p50
      %p178 = pneg %p47
      %p179 = pneg %p71
      %p180 = pneg %p68
      %p181 = pneg %p99
      %p182 = pneg %p96
      %s183 = smul.u32 2, %s20
      %p184 = scmp.lt.s32.totalorder %s19, 1
      %s185 = scalar_select %p184, %s19, 1
      %p186 = scmp.lt.s32.totalorder %s183, 1
      %s187 = scalar_select %p186, %s183, 1
      %s188 = smul.addr %s185, 8
      %s189 = sadd.s32 %s187, %s188
      %s190 = smul.addr %s189, 8
      %s191 = scalar_lea.vmem %s2, %s190
      %p192 = pneg %p127
      %p193 = pneg %p124
      %p194 = scmp.lt.s32.totalorder %s19, 1
      %s195 = scalar_select %p194, %s19, 1
      %p196 = scmp.lt.s32.totalorder %s20, 0
      %s197 = scalar_select %p196, %s20, 0
      %s198 = smul.addr %s197, 4
      %s199 = smul.addr %s195, 4
      %s200 = sadd.s32 %s198, %s199
      %s201 = smul.addr %s200, 8
      %s202 = scalar_lea.vmem %s3, %s201
      %p203 = scmp.lt.s32.totalorder %s19, 1
      %s204 = scalar_select %p203, %s19, 1
      %p205 = scmp.lt.s32.totalorder %s20, 0
      %s206 = scalar_select %p205, %s20, 0
      %s207 = smul.addr %s206, 12
      %s208 = smul.addr %s204, 12
      %s209 = sadd.s32 %s207, %s208
      %s210 = smul.addr %s209, 8
      %s211 = scalar_lea.vmem %s0, %s210
      %s212 = smul.u32 2, %s20
      %p213 = scmp.lt.s32.totalorder %s19, 1
      %s214 = scalar_select %p213, %s19, 1
      %p215 = scmp.lt.s32.totalorder %s212, 1
      %s216 = scalar_select %p215, %s212, 1
      %s217 = smul.addr %s214, 8
      %s218 = sadd.s32 %s216, %s217
      %s219 = smul.addr %s218, 8
      %s220 = scalar_lea.vmem %s2, %s219
      %s221 = smul.u32 2, %s20
      %p222 = scmp.lt.s32.totalorder %s19, 1
      %s223 = scalar_select %p222, %s19, 1
      %p224 = scmp.lt.s32.totalorder %s20, 0
      %s225 = scalar_select %p224, %s20, 0
      %s226 = smul.addr %s225, 4
      %s227 = smul.addr %s223, 4
      %s228 = sadd.s32 %s226, %s227
      %s229 = smul.addr %s228, 8
      %s230 = scalar_lea.vmem %s3, %s229
      %v231 = vld [vmem:[%s211] sm:$0xff]
      %v232 = vld [vmem:[%s211 + $0x8] sm:$0xff]
      %v233 = vld [vmem:[%s211 + $0x10] sm:$0x3]
      %v234 = vld [vmem:[%s211 + $0x18] sm:$0xff]
      %v235 = vld [vmem:[%s211 + $0x20] sm:$0xff]
      %v236 = vld [vmem:[%s211 + $0x28] sm:$0x3]
      %v237 = vld [vmem:[%s211 + $0x30] sm:$0xff]
      %v238 = vld [vmem:[%s211 + $0x38] sm:$0xff]
      %v239 = vld [vmem:[%s211 + $0x40] sm:$0x3]
      %v240 = vld [vmem:[%s211 + $0x48] sm:$0xff]
      %v241 = vld [vmem:[%s211 + $0x50] sm:$0xff]
      %v242 = vld [vmem:[%s211 + $0x58] sm:$0x3]
      %v243 = vcombine.low %v231, %v237
      %v244 = vcombine.high %v231, %v237
      %v246 = vunpack.c.l.s4 1983009808
      %v247 = vunpack.c.0.s8 %v246
      %v248 = vlaneseq
      %v249 = vshrl.u32 %v248, 7
      %v250 = vsub.s32 %v247, %v249
      %v251 = vrot.slane %v243, %v250
      %v253 = vunpack.c.l.s4 1983009808
      %v254 = vunpack.c.0.s8 %v253
      %v255 = vlaneseq
      %v256 = vshrl.u32 %v255, 7
      %v257 = vsub.s32 %v254, %v256
      %v258 = vrot.slane %v244, %v257
      %v259 = vcombine.low %v234, %v240
      %v260 = vcombine.high %v234, %v240
      %v262 = vunpack.c.l.s4 1983009808
      %v263 = vunpack.c.0.s8 %v262
      %v264 = vlaneseq
      %v265 = vshrl.u32 %v264, 7
      %v266 = vsub.s32 %v263, %v265
      %v267 = vrot.slane %v259, %v266
      %v269 = vunpack.c.l.s4 1983009808
      %v270 = vunpack.c.0.s8 %v269
      %v271 = vlaneseq
      %v272 = vshrl.u32 %v271, 7
      %v273 = vsub.s32 %v270, %v272
      %v274 = vrot.slane %v260, %v273
      %v275 = vcombine.low %v251, %v267
      %v276 = vcombine.high %v251, %v267
      %v278 = vunpack.c.l.s4 1934713408
      %v279 = vunpack.c.0.s8 %v278
      %v280 = vlaneseq
      %v281 = vshrl.u32 %v280, 7
      %v282 = vsub.s32 %v279, %v281
      %v283 = vrot.slane %v275, %v282
      %v285 = vunpack.c.l.s4 1934713408
      %v286 = vunpack.c.0.s8 %v285
      %v287 = vlaneseq
      %v288 = vshrl.u32 %v287, 7
      %v289 = vsub.s32 %v286, %v288
      %v290 = vrot.slane %v276, %v289
      %v291 = vcombine.low %v258, %v274
      %v292 = vcombine.high %v258, %v274
      %v294 = vunpack.c.l.s4 1934713408
      %v295 = vunpack.c.0.s8 %v294
      %v296 = vlaneseq
      %v297 = vshrl.u32 %v296, 7
      %v298 = vsub.s32 %v295, %v297
      %v299 = vrot.slane %v291, %v298
      %v301 = vunpack.c.l.s4 1934713408
      %v302 = vunpack.c.0.s8 %v301
      %v303 = vlaneseq
      %v304 = vshrl.u32 %v303, 7
      %v305 = vsub.s32 %v302, %v304
      %v306 = vrot.slane %v292, %v305
      %v307 = vcombine.high %v283, 0.0
      %v308 = vcombine.high %v290, 0.0
      %v309 = vcombine.high %v299, 0.0
      %v310 = vcombine.high %v306, 0.0
      %v311 = vcombine.low %v232, %v238
      %v312 = vcombine.high %v232, %v238
      %v314 = vunpack.c.l.s4 1983009808
      %v315 = vunpack.c.0.s8 %v314
      %v316 = vlaneseq
      %v317 = vshrl.u32 %v316, 7
      %v318 = vsub.s32 %v315, %v317
      %v319 = vrot.slane %v311, %v318
      %v321 = vunpack.c.l.s4 1983009808
      %v322 = vunpack.c.0.s8 %v321
      %v323 = vlaneseq
      %v324 = vshrl.u32 %v323, 7
      %v325 = vsub.s32 %v322, %v324
      %v326 = vrot.slane %v312, %v325
      %v327 = vcombine.low %v235, %v241
      %v328 = vcombine.high %v235, %v241
      %v330 = vunpack.c.l.s4 1983009808
      %v331 = vunpack.c.0.s8 %v330
      %v332 = vlaneseq
      %v333 = vshrl.u32 %v332, 7
      %v334 = vsub.s32 %v331, %v333
      %v335 = vrot.slane %v327, %v334
      %v337 = vunpack.c.l.s4 1983009808
      %v338 = vunpack.c.0.s8 %v337
      %v339 = vlaneseq
      %v340 = vshrl.u32 %v339, 7
      %v341 = vsub.s32 %v338, %v340
      %v342 = vrot.slane %v328, %v341
      %v343 = vcombine.low %v319, %v335
      %v344 = vcombine.high %v319, %v335
      %v346 = vunpack.c.l.s4 1934713408
      %v347 = vunpack.c.0.s8 %v346
      %v348 = vlaneseq
      %v349 = vshrl.u32 %v348, 7
      %v350 = vsub.s32 %v347, %v349
      %v351 = vrot.slane %v343, %v350
      %v353 = vunpack.c.l.s4 1934713408
      %v354 = vunpack.c.0.s8 %v353
      %v355 = vlaneseq
      %v356 = vshrl.u32 %v355, 7
      %v357 = vsub.s32 %v354, %v356
      %v358 = vrot.slane %v344, %v357
      %v359 = vcombine.low %v326, %v342
      %v360 = vcombine.high %v326, %v342
      %v362 = vunpack.c.l.s4 1934713408
      %v363 = vunpack.c.0.s8 %v362
      %v364 = vlaneseq
      %v365 = vshrl.u32 %v364, 7
      %v366 = vsub.s32 %v363, %v365
      %v367 = vrot.slane %v359, %v366
      %v369 = vunpack.c.l.s4 1934713408
      %v370 = vunpack.c.0.s8 %v369
      %v371 = vlaneseq
      %v372 = vshrl.u32 %v371, 7
      %v373 = vsub.s32 %v370, %v372
      %v374 = vrot.slane %v360, %v373
      %v375 = vcombine.high %v351, 0.0
      %v376 = vcombine.high %v358, 0.0
      %v377 = vcombine.high %v367, 0.0
      %v378 = vcombine.high %v374, 0.0
      %380 = vrot.lane.b32.xlu0 %v307, 16
      %v381 = vpop.permute.xlu0 %380
      %384 = vrot.lane.b32.xlu0 %v290, 32
      %v385 = vpop.permute.xlu0 %384
      %388 = vrot.lane.b32.xlu0 %v308, 48
      %v389 = vpop.permute.xlu0 %388
      %392 = vrot.lane.b32.xlu0 %v299, 64
      %v393 = vpop.permute.xlu0 %392
      %396 = vrot.lane.b32.xlu0 %v309, 80
      %v397 = vpop.permute.xlu0 %396
      %400 = vrot.lane.b32.xlu0 %v306, 96
      %v401 = vpop.permute.xlu0 %400
      %404 = vrot.lane.b32.xlu0 %v310, 112
      %v405 = vpop.permute.xlu0 %404
      %408 = vrot.lane.b32.xlu0 %v375, 16
      %v409 = vpop.permute.xlu0 %408
      %412 = vrot.lane.b32.xlu0 %v358, 32
      %v413 = vpop.permute.xlu0 %412
      %416 = vrot.lane.b32.xlu0 %v376, 48
      %v417 = vpop.permute.xlu0 %416
      %420 = vrot.lane.b32.xlu0 %v367, 64
      %v421 = vpop.permute.xlu0 %420
      %424 = vrot.lane.b32.xlu0 %v377, 80
      %v425 = vpop.permute.xlu0 %424
      %428 = vrot.lane.b32.xlu0 %v374, 96
      %v429 = vpop.permute.xlu0 %428
      %432 = vrot.lane.b32.xlu0 %v378, 112
      %v433 = vpop.permute.xlu0 %432
      %vm435 = vcmask 130048
      %v436 = vsel %vm435, %v283, %v381
      %vm437 = vcmask 261120
      %v438 = vsel %vm437, %v436, %v385
      %vm439 = vcmask 392192
      %v440 = vsel %vm439, %v438, %v389
      %vm441 = vcmask 523264
      %v442 = vsel %vm441, %v440, %v393
      %vm443 = vcmask 654336
      %v444 = vsel %vm443, %v442, %v397
      %vm445 = vcmask 785408
      %v446 = vsel %vm445, %v444, %v401
      %vm447 = vcmask 916480
      %v448 = vsel %vm447, %v446, %v405
      %v449 = vsel %vm435, %v351, %v409
      %v450 = vsel %vm437, %v449, %v413
      %v451 = vsel %vm439, %v450, %v417
      %v452 = vsel %vm441, %v451, %v421
      %v453 = vsel %vm443, %v452, %v425
      %v454 = vsel %vm445, %v453, %v429
      %v455 = vsel %vm447, %v454, %v433
      %464 = vrot.lane.b32.xlu0 %v231, 127
      %v465 = vpop.permute.xlu0 %464
      %466 = vrot.lane.b32.xlu0 %v232, 127
      %v467 = vpop.permute.xlu0 %466
      %468 = vrot.lane.b32.xlu0 %v234, 127
      %v469 = vpop.permute.xlu0 %468
      %470 = vrot.lane.b32.xlu0 %v235, 127
      %v471 = vpop.permute.xlu0 %470
      %472 = vrot.lane.b32.xlu0 %v237, 127
      %v473 = vpop.permute.xlu0 %472
      %474 = vrot.lane.b32.xlu0 %v238, 127
      %v475 = vpop.permute.xlu0 %474
      %476 = vrot.lane.b32.xlu0 %v240, 127
      %v477 = vpop.permute.xlu0 %476
      %478 = vrot.lane.b32.xlu0 %v241, 127
      %v479 = vpop.permute.xlu0 %478
      %v488 = vcombine.low %v465, %v473
      %v489 = vcombine.high %v465, %v473
      %v491 = vunpack.c.l.s4 1983009808
      %v492 = vunpack.c.0.s8 %v491
      %v493 = vlaneseq
      %v494 = vshrl.u32 %v493, 7
      %v495 = vsub.s32 %v492, %v494
      %v496 = vrot.slane %v488, %v495
      %v498 = vunpack.c.l.s4 1983009808
      %v499 = vunpack.c.0.s8 %v498
      %v500 = vlaneseq
      %v501 = vshrl.u32 %v500, 7
      %v502 = vsub.s32 %v499, %v501
      %v503 = vrot.slane %v489, %v502
      %v504 = vcombine.low %v469, %v477
      %v505 = vcombine.high %v469, %v477
      %v507 = vunpack.c.l.s4 1983009808
      %v508 = vunpack.c.0.s8 %v507
      %v509 = vlaneseq
      %v510 = vshrl.u32 %v509, 7
      %v511 = vsub.s32 %v508, %v510
      %v512 = vrot.slane %v504, %v511
      %v514 = vunpack.c.l.s4 1983009808
      %v515 = vunpack.c.0.s8 %v514
      %v516 = vlaneseq
      %v517 = vshrl.u32 %v516, 7
      %v518 = vsub.s32 %v515, %v517
      %v519 = vrot.slane %v505, %v518
      %v520 = vcombine.low %v496, %v512
      %v521 = vcombine.high %v496, %v512
      %v523 = vunpack.c.l.s4 1934713408
      %v524 = vunpack.c.0.s8 %v523
      %v525 = vlaneseq
      %v526 = vshrl.u32 %v525, 7
      %v527 = vsub.s32 %v524, %v526
      %v528 = vrot.slane %v520, %v527
      %v530 = vunpack.c.l.s4 1934713408
      %v531 = vunpack.c.0.s8 %v530
      %v532 = vlaneseq
      %v533 = vshrl.u32 %v532, 7
      %v534 = vsub.s32 %v531, %v533
      %v535 = vrot.slane %v521, %v534
      %v536 = vcombine.low %v503, %v519
      %v537 = vcombine.high %v503, %v519
      %v539 = vunpack.c.l.s4 1934713408
      %v540 = vunpack.c.0.s8 %v539
      %v541 = vlaneseq
      %v542 = vshrl.u32 %v541, 7
      %v543 = vsub.s32 %v540, %v542
      %v544 = vrot.slane %v536, %v543
      %v546 = vunpack.c.l.s4 1934713408
      %v547 = vunpack.c.0.s8 %v546
      %v548 = vlaneseq
      %v549 = vshrl.u32 %v548, 7
      %v550 = vsub.s32 %v547, %v549
      %v551 = vrot.slane %v537, %v550
      %v552 = vcombine.high %v528, 0.0
      %v553 = vcombine.high %v535, 0.0
      %v554 = vcombine.high %v544, 0.0
      %v555 = vcombine.high %v551, 0.0
      %v556 = vcombine.low %v467, %v475
      %v557 = vcombine.high %v467, %v475
      %v559 = vunpack.c.l.s4 1983009808
      %v560 = vunpack.c.0.s8 %v559
      %v561 = vlaneseq
      %v562 = vshrl.u32 %v561, 7
      %v563 = vsub.s32 %v560, %v562
      %v564 = vrot.slane %v556, %v563
      %v566 = vunpack.c.l.s4 1983009808
      %v567 = vunpack.c.0.s8 %v566
      %v568 = vlaneseq
      %v569 = vshrl.u32 %v568, 7
      %v570 = vsub.s32 %v567, %v569
      %v571 = vrot.slane %v557, %v570
      %v572 = vcombine.low %v471, %v479
      %v573 = vcombine.high %v471, %v479
      %v575 = vunpack.c.l.s4 1983009808
      %v576 = vunpack.c.0.s8 %v575
      %v577 = vlaneseq
      %v578 = vshrl.u32 %v577, 7
      %v579 = vsub.s32 %v576, %v578
      %v580 = vrot.slane %v572, %v579
      %v582 = vunpack.c.l.s4 1983009808
      %v583 = vunpack.c.0.s8 %v582
      %v584 = vlaneseq
      %v585 = vshrl.u32 %v584, 7
      %v586 = vsub.s32 %v583, %v585
      %v587 = vrot.slane %v573, %v586
      %v588 = vcombine.low %v564, %v580
      %v589 = vcombine.high %v564, %v580
      %v591 = vunpack.c.l.s4 1934713408
      %v592 = vunpack.c.0.s8 %v591
      %v593 = vlaneseq
      %v594 = vshrl.u32 %v593, 7
      %v595 = vsub.s32 %v592, %v594
      %v596 = vrot.slane %v588, %v595
      %v598 = vunpack.c.l.s4 1934713408
      %v599 = vunpack.c.0.s8 %v598
      %v600 = vlaneseq
      %v601 = vshrl.u32 %v600, 7
      %v602 = vsub.s32 %v599, %v601
      %v603 = vrot.slane %v589, %v602
      %v604 = vcombine.low %v571, %v587
      %v605 = vcombine.high %v571, %v587
      %v607 = vunpack.c.l.s4 1934713408
      %v608 = vunpack.c.0.s8 %v607
      %v609 = vlaneseq
      %v610 = vshrl.u32 %v609, 7
      %v611 = vsub.s32 %v608, %v610
      %v612 = vrot.slane %v604, %v611
      %v614 = vunpack.c.l.s4 1934713408
      %v615 = vunpack.c.0.s8 %v614
      %v616 = vlaneseq
      %v617 = vshrl.u32 %v616, 7
      %v618 = vsub.s32 %v615, %v617
      %v619 = vrot.slane %v605, %v618
      %v620 = vcombine.high %v596, 0.0
      %v621 = vcombine.high %v603, 0.0
      %v622 = vcombine.high %v612, 0.0
      %v623 = vcombine.high %v619, 0.0
      %625 = vrot.lane.b32.xlu0 %v552, 16
      %v626 = vpop.permute.xlu0 %625
      %629 = vrot.lane.b32.xlu0 %v535, 32
      %v630 = vpop.permute.xlu0 %629
      %633 = vrot.lane.b32.xlu0 %v553, 48
      %v634 = vpop.permute.xlu0 %633
      %637 = vrot.lane.b32.xlu0 %v544, 64
      %v638 = vpop.permute.xlu0 %637
      %641 = vrot.lane.b32.xlu0 %v554, 80
      %v642 = vpop.permute.xlu0 %641
      %645 = vrot.lane.b32.xlu0 %v551, 96
      %v646 = vpop.permute.xlu0 %645
      %649 = vrot.lane.b32.xlu0 %v555, 112
      %v650 = vpop.permute.xlu0 %649
      %653 = vrot.lane.b32.xlu0 %v620, 16
      %v654 = vpop.permute.xlu0 %653
      %657 = vrot.lane.b32.xlu0 %v603, 32
      %v658 = vpop.permute.xlu0 %657
      %661 = vrot.lane.b32.xlu0 %v621, 48
      %v662 = vpop.permute.xlu0 %661
      %665 = vrot.lane.b32.xlu0 %v612, 64
      %v666 = vpop.permute.xlu0 %665
      %669 = vrot.lane.b32.xlu0 %v622, 80
      %v670 = vpop.permute.xlu0 %669
      %673 = vrot.lane.b32.xlu0 %v619, 96
      %v674 = vpop.permute.xlu0 %673
      %677 = vrot.lane.b32.xlu0 %v623, 112
      %v678 = vpop.permute.xlu0 %677
      %v680 = vsel %vm435, %v528, %v626
      %v681 = vsel %vm437, %v680, %v630
      %v682 = vsel %vm439, %v681, %v634
      %v683 = vsel %vm441, %v682, %v638
      %v684 = vsel %vm443, %v683, %v642
      %v685 = vsel %vm445, %v684, %v646
      %v686 = vsel %vm447, %v685, %v650
      %v687 = vsel %vm435, %v596, %v654
      %v688 = vsel %vm437, %v687, %v658
      %v689 = vsel %vm439, %v688, %v662
      %v690 = vsel %vm441, %v689, %v666
      %v691 = vsel %vm443, %v690, %v670
      %v692 = vsel %vm445, %v691, %v674
      %v693 = vsel %vm447, %v692, %v678
      %694 = vrot.lane.b32.xlu0 %v231, 126
      %v695 = vpop.permute.xlu0 %694
      %696 = vrot.lane.b32.xlu0 %v232, 126
      %v697 = vpop.permute.xlu0 %696
      %698 = vrot.lane.b32.xlu0 %v234, 126
      %v699 = vpop.permute.xlu0 %698
      %700 = vrot.lane.b32.xlu0 %v235, 126
      %v701 = vpop.permute.xlu0 %700
      %702 = vrot.lane.b32.xlu0 %v237, 126
      %v703 = vpop.permute.xlu0 %702
      %704 = vrot.lane.b32.xlu0 %v238, 126
      %v705 = vpop.permute.xlu0 %704
      %706 = vrot.lane.b32.xlu0 %v240, 126
      %v707 = vpop.permute.xlu0 %706
      %708 = vrot.lane.b32.xlu0 %v241, 126
      %v709 = vpop.permute.xlu0 %708
      %v718 = vcombine.low %v695, %v703
      %v719 = vcombine.high %v695, %v703
      %v721 = vunpack.c.l.s4 1983009808
      %v722 = vunpack.c.0.s8 %v721
      %v723 = vlaneseq
      %v724 = vshrl.u32 %v723, 7
      %v725 = vsub.s32 %v722, %v724
      %v726 = vrot.slane %v718, %v725
      %v728 = vunpack.c.l.s4 1983009808
      %v729 = vunpack.c.0.s8 %v728
      %v730 = vlaneseq
      %v731 = vshrl.u32 %v730, 7
      %v732 = vsub.s32 %v729, %v731
      %v733 = vrot.slane %v719, %v732
      %v734 = vcombine.low %v699, %v707
      %v735 = vcombine.high %v699, %v707
      %v737 = vunpack.c.l.s4 1983009808
      %v738 = vunpack.c.0.s8 %v737
      %v739 = vlaneseq
      %v740 = vshrl.u32 %v739, 7
      %v741 = vsub.s32 %v738, %v740
      %v742 = vrot.slane %v734, %v741
      %v744 = vunpack.c.l.s4 1983009808
      %v745 = vunpack.c.0.s8 %v744
      %v746 = vlaneseq
      %v747 = vshrl.u32 %v746, 7
      %v748 = vsub.s32 %v745, %v747
      %v749 = vrot.slane %v735, %v748
      %v750 = vcombine.low %v726, %v742
      %v751 = vcombine.high %v726, %v742
      %v753 = vunpack.c.l.s4 1934713408
      %v754 = vunpack.c.0.s8 %v753
      %v755 = vlaneseq
      %v756 = vshrl.u32 %v755, 7
      %v757 = vsub.s32 %v754, %v756
      %v758 = vrot.slane %v750, %v757
      %v760 = vunpack.c.l.s4 1934713408
      %v761 = vunpack.c.0.s8 %v760
      %v762 = vlaneseq
      %v763 = vshrl.u32 %v762, 7
      %v764 = vsub.s32 %v761, %v763
      %v765 = vrot.slane %v751, %v764
      %v766 = vcombine.low %v733, %v749
      %v767 = vcombine.high %v733, %v749
      %v769 = vunpack.c.l.s4 1934713408
      %v770 = vunpack.c.0.s8 %v769
      %v771 = vlaneseq
      %v772 = vshrl.u32 %v771, 7
      %v773 = vsub.s32 %v770, %v772
      %v774 = vrot.slane %v766, %v773
      %v776 = vunpack.c.l.s4 1934713408
      %v777 = vunpack.c.0.s8 %v776
      %v778 = vlaneseq
      %v779 = vshrl.u32 %v778, 7
      %v780 = vsub.s32 %v777, %v779
      %v781 = vrot.slane %v767, %v780
      %v782 = vcombine.high %v758, 0.0
      %v783 = vcombine.high %v765, 0.0
      %v784 = vcombine.high %v774, 0.0
      %v785 = vcombine.high %v781, 0.0
      %v786 = vcombine.low %v697, %v705
      %v787 = vcombine.high %v697, %v705
      %v789 = vunpack.c.l.s4 1983009808
      %v790 = vunpack.c.0.s8 %v789
      %v791 = vlaneseq
      %v792 = vshrl.u32 %v791, 7
      %v793 = vsub.s32 %v790, %v792
      %v794 = vrot.slane %v786, %v793
      %v796 = vunpack.c.l.s4 1983009808
      %v797 = vunpack.c.0.s8 %v796
      %v798 = vlaneseq
      %v799 = vshrl.u32 %v798, 7
      %v800 = vsub.s32 %v797, %v799
      %v801 = vrot.slane %v787, %v800
      %v802 = vcombine.low %v701, %v709
      %v803 = vcombine.high %v701, %v709
      %v805 = vunpack.c.l.s4 1983009808
      %v806 = vunpack.c.0.s8 %v805
      %v807 = vlaneseq
      %v808 = vshrl.u32 %v807, 7
      %v809 = vsub.s32 %v806, %v808
      %v810 = vrot.slane %v802, %v809
      %v812 = vunpack.c.l.s4 1983009808
      %v813 = vunpack.c.0.s8 %v812
      %v814 = vlaneseq
      %v815 = vshrl.u32 %v814, 7
      %v816 = vsub.s32 %v813, %v815
      %v817 = vrot.slane %v803, %v816
      %v818 = vcombine.low %v794, %v810
      %v819 = vcombine.high %v794, %v810
      %v821 = vunpack.c.l.s4 1934713408
      %v822 = vunpack.c.0.s8 %v821
      %v823 = vlaneseq
      %v824 = vshrl.u32 %v823, 7
      %v825 = vsub.s32 %v822, %v824
      %v826 = vrot.slane %v818, %v825
      %v828 = vunpack.c.l.s4 1934713408
      %v829 = vunpack.c.0.s8 %v828
      %v830 = vlaneseq
      %v831 = vshrl.u32 %v830, 7
      %v832 = vsub.s32 %v829, %v831
      %v833 = vrot.slane %v819, %v832
      %v834 = vcombine.low %v801, %v817
      %v835 = vcombine.high %v801, %v817
      %v837 = vunpack.c.l.s4 1934713408
      %v838 = vunpack.c.0.s8 %v837
      %v839 = vlaneseq
      %v840 = vshrl.u32 %v839, 7
      %v841 = vsub.s32 %v838, %v840
      %v842 = vrot.slane %v834, %v841
      %v844 = vunpack.c.l.s4 1934713408
      %v845 = vunpack.c.0.s8 %v844
      %v846 = vlaneseq
      %v847 = vshrl.u32 %v846, 7
      %v848 = vsub.s32 %v845, %v847
      %v849 = vrot.slane %v835, %v848
      %v850 = vcombine.high %v826, 0.0
      %v851 = vcombine.high %v833, 0.0
      %v852 = vcombine.high %v842, 0.0
      %v853 = vcombine.high %v849, 0.0
      %855 = vrot.lane.b32.xlu0 %v782, 16
      %v856 = vpop.permute.xlu0 %855
      %859 = vrot.lane.b32.xlu0 %v765, 32
      %v860 = vpop.permute.xlu0 %859
      %863 = vrot.lane.b32.xlu0 %v783, 48
      %v864 = vpop.permute.xlu0 %863
      %867 = vrot.lane.b32.xlu0 %v774, 64
      %v868 = vpop.permute.xlu0 %867
      %871 = vrot.lane.b32.xlu0 %v784, 80
      %v872 = vpop.permute.xlu0 %871
      %875 = vrot.lane.b32.xlu0 %v781, 96
      %v876 = vpop.permute.xlu0 %875
      %879 = vrot.lane.b32.xlu0 %v785, 112
      %v880 = vpop.permute.xlu0 %879
      %883 = vrot.lane.b32.xlu0 %v850, 16
      %v884 = vpop.permute.xlu0 %883
      %887 = vrot.lane.b32.xlu0 %v833, 32
      %v888 = vpop.permute.xlu0 %887
      %891 = vrot.lane.b32.xlu0 %v851, 48
      %v892 = vpop.permute.xlu0 %891
      %895 = vrot.lane.b32.xlu0 %v842, 64
      %v896 = vpop.permute.xlu0 %895
      %899 = vrot.lane.b32.xlu0 %v852, 80
      %v900 = vpop.permute.xlu0 %899
      %903 = vrot.lane.b32.xlu0 %v849, 96
      %v904 = vpop.permute.xlu0 %903
      %907 = vrot.lane.b32.xlu0 %v853, 112
      %v908 = vpop.permute.xlu0 %907
      %v910 = vsel %vm435, %v758, %v856
      %v911 = vsel %vm437, %v910, %v860
      %v912 = vsel %vm439, %v911, %v864
      %v913 = vsel %vm441, %v912, %v868
      %v914 = vsel %vm443, %v913, %v872
      %v915 = vsel %vm445, %v914, %v876
      %v916 = vsel %vm447, %v915, %v880
      %v917 = vsel %vm435, %v826, %v884
      %v918 = vsel %vm437, %v917, %v888
      %v919 = vsel %vm439, %v918, %v892
      %v920 = vsel %vm441, %v919, %v896
      %v921 = vsel %vm443, %v920, %v900
      %v922 = vsel %vm445, %v921, %v904
      %v923 = vsel %vm447, %v922, %v908
      %vm928 = vcmask 1046528
      %v929 = vrot.slane %v231, 1
      %v930 = vrot.slane %v232, 1
      %v931 = vsel %vm928, %v929, %v930
      %v932 = vrot.slane %v233, 1
      %v933 = vsel %vm928, %v930, %v932
      %v934 = vrot.slane %v234, 1
      %v935 = vrot.slane %v235, 1
      %v936 = vsel %vm928, %v934, %v935
      %v937 = vrot.slane %v236, 1
      %v938 = vsel %vm928, %v935, %v937
      %v939 = vrot.slane %v237, 1
      %v940 = vrot.slane %v238, 1
      %v941 = vsel %vm928, %v939, %v940
      %v942 = vrot.slane %v239, 1
      %v943 = vsel %vm928, %v940, %v942
      %v944 = vrot.slane %v240, 1
      %v945 = vrot.slane %v241, 1
      %v946 = vsel %vm928, %v944, %v945
      %v947 = vrot.slane %v242, 1
      %v948 = vsel %vm928, %v945, %v947
      %v957 = vcombine.low %v931, %v941
      %v958 = vcombine.high %v931, %v941
      %v960 = vunpack.c.l.s4 1983009808
      %v961 = vunpack.c.0.s8 %v960
      %v962 = vlaneseq
      %v963 = vshrl.u32 %v962, 7
      %v964 = vsub.s32 %v961, %v963
      %v965 = vrot.slane %v957, %v964
      %v967 = vunpack.c.l.s4 1983009808
      %v968 = vunpack.c.0.s8 %v967
      %v969 = vlaneseq
      %v970 = vshrl.u32 %v969, 7
      %v971 = vsub.s32 %v968, %v970
      %v972 = vrot.slane %v958, %v971
      %v973 = vcombine.low %v936, %v946
      %v974 = vcombine.high %v936, %v946
      %v976 = vunpack.c.l.s4 1983009808
      %v977 = vunpack.c.0.s8 %v976
      %v978 = vlaneseq
      %v979 = vshrl.u32 %v978, 7
      %v980 = vsub.s32 %v977, %v979
      %v981 = vrot.slane %v973, %v980
      %v983 = vunpack.c.l.s4 1983009808
      %v984 = vunpack.c.0.s8 %v983
      %v985 = vlaneseq
      %v986 = vshrl.u32 %v985, 7
      %v987 = vsub.s32 %v984, %v986
      %v988 = vrot.slane %v974, %v987
      %v989 = vcombine.low %v965, %v981
      %v990 = vcombine.high %v965, %v981
      %v992 = vunpack.c.l.s4 1934713408
      %v993 = vunpack.c.0.s8 %v992
      %v994 = vlaneseq
      %v995 = vshrl.u32 %v994, 7
      %v996 = vsub.s32 %v993, %v995
      %v997 = vrot.slane %v989, %v996
      %v999 = vunpack.c.l.s4 1934713408
      %v1000 = vunpack.c.0.s8 %v999
      %v1001 = vlaneseq
      %v1002 = vshrl.u32 %v1001, 7
      %v1003 = vsub.s32 %v1000, %v1002
      %v1004 = vrot.slane %v990, %v1003
      %v1005 = vcombine.low %v972, %v988
      %v1006 = vcombine.high %v972, %v988
      %v1008 = vunpack.c.l.s4 1934713408
      %v1009 = vunpack.c.0.s8 %v1008
      %v1010 = vlaneseq
      %v1011 = vshrl.u32 %v1010, 7
      %v1012 = vsub.s32 %v1009, %v1011
      %v1013 = vrot.slane %v1005, %v1012
      %v1015 = vunpack.c.l.s4 1934713408
      %v1016 = vunpack.c.0.s8 %v1015
      %v1017 = vlaneseq
      %v1018 = vshrl.u32 %v1017, 7
      %v1019 = vsub.s32 %v1016, %v1018
      %v1020 = vrot.slane %v1006, %v1019
      %v1021 = vcombine.high %v997, 0.0
      %v1022 = vcombine.high %v1004, 0.0
      %v1023 = vcombine.high %v1013, 0.0
      %v1024 = vcombine.high %v1020, 0.0
      %v1025 = vcombine.low %v933, %v943
      %v1026 = vcombine.high %v933, %v943
      %v1028 = vunpack.c.l.s4 1983009808
      %v1029 = vunpack.c.0.s8 %v1028
      %v1030 = vlaneseq
      %v1031 = vshrl.u32 %v1030, 7
      %v1032 = vsub.s32 %v1029, %v1031
      %v1033 = vrot.slane %v1025, %v1032
      %v1035 = vunpack.c.l.s4 1983009808
      %v1036 = vunpack.c.0.s8 %v1035
      %v1037 = vlaneseq
      %v1038 = vshrl.u32 %v1037, 7
      %v1039 = vsub.s32 %v1036, %v1038
      %v1040 = vrot.slane %v1026, %v1039
      %v1041 = vcombine.low %v938, %v948
      %v1042 = vcombine.high %v938, %v948
      %v1044 = vunpack.c.l.s4 1983009808
      %v1045 = vunpack.c.0.s8 %v1044
      %v1046 = vlaneseq
      %v1047 = vshrl.u32 %v1046, 7
      %v1048 = vsub.s32 %v1045, %v1047
      %v1049 = vrot.slane %v1041, %v1048
      %v1051 = vunpack.c.l.s4 1983009808
      %v1052 = vunpack.c.0.s8 %v1051
      %v1053 = vlaneseq
      %v1054 = vshrl.u32 %v1053, 7
      %v1055 = vsub.s32 %v1052, %v1054
      %v1056 = vrot.slane %v1042, %v1055
      %v1057 = vcombine.low %v1033, %v1049
      %v1058 = vcombine.high %v1033, %v1049
      %v1060 = vunpack.c.l.s4 1934713408
      %v1061 = vunpack.c.0.s8 %v1060
      %v1062 = vlaneseq
      %v1063 = vshrl.u32 %v1062, 7
      %v1064 = vsub.s32 %v1061, %v1063
      %v1065 = vrot.slane %v1057, %v1064
      %v1067 = vunpack.c.l.s4 1934713408
      %v1068 = vunpack.c.0.s8 %v1067
      %v1069 = vlaneseq
      %v1070 = vshrl.u32 %v1069, 7
      %v1071 = vsub.s32 %v1068, %v1070
      %v1072 = vrot.slane %v1058, %v1071
      %v1073 = vcombine.low %v1040, %v1056
      %v1074 = vcombine.high %v1040, %v1056
      %v1076 = vunpack.c.l.s4 1934713408
      %v1077 = vunpack.c.0.s8 %v1076
      %v1078 = vlaneseq
      %v1079 = vshrl.u32 %v1078, 7
      %v1080 = vsub.s32 %v1077, %v1079
      %v1081 = vrot.slane %v1073, %v1080
      %v1083 = vunpack.c.l.s4 1934713408
      %v1084 = vunpack.c.0.s8 %v1083
      %v1085 = vlaneseq
      %v1086 = vshrl.u32 %v1085, 7
      %v1087 = vsub.s32 %v1084, %v1086
      %v1088 = vrot.slane %v1074, %v1087
      %v1089 = vcombine.high %v1065, 0.0
      %v1090 = vcombine.high %v1072, 0.0
      %v1091 = vcombine.high %v1081, 0.0
      %v1092 = vcombine.high %v1088, 0.0
      %1094 = vrot.lane.b32.xlu0 %v1021, 16
      %v1095 = vpop.permute.xlu0 %1094
      %1098 = vrot.lane.b32.xlu0 %v1004, 32
      %v1099 = vpop.permute.xlu0 %1098
      %1102 = vrot.lane.b32.xlu0 %v1022, 48
      %v1103 = vpop.permute.xlu0 %1102
      %1106 = vrot.lane.b32.xlu0 %v1013, 64
      %v1107 = vpop.permute.xlu0 %1106
      %1110 = vrot.lane.b32.xlu0 %v1023, 80
      %v1111 = vpop.permute.xlu0 %1110
      %1114 = vrot.lane.b32.xlu0 %v1020, 96
      %v1115 = vpop.permute.xlu0 %1114
      %1118 = vrot.lane.b32.xlu0 %v1024, 112
      %v1119 = vpop.permute.xlu0 %1118
      %1122 = vrot.lane.b32.xlu0 %v1089, 16
      %v1123 = vpop.permute.xlu0 %1122
      %1126 = vrot.lane.b32.xlu0 %v1072, 32
      %v1127 = vpop.permute.xlu0 %1126
      %1130 = vrot.lane.b32.xlu0 %v1090, 48
      %v1131 = vpop.permute.xlu0 %1130
      %1134 = vrot.lane.b32.xlu0 %v1081, 64
      %v1135 = vpop.permute.xlu0 %1134
      %1138 = vrot.lane.b32.xlu0 %v1091, 80
      %v1139 = vpop.permute.xlu0 %1138
      %1142 = vrot.lane.b32.xlu0 %v1088, 96
      %v1143 = vpop.permute.xlu0 %1142
      %1146 = vrot.lane.b32.xlu0 %v1092, 112
      %v1147 = vpop.permute.xlu0 %1146
      %v1149 = vsel %vm435, %v997, %v1095
      %v1150 = vsel %vm437, %v1149, %v1099
      %v1151 = vsel %vm439, %v1150, %v1103
      %v1152 = vsel %vm441, %v1151, %v1107
      %v1153 = vsel %vm443, %v1152, %v1111
      %v1154 = vsel %vm445, %v1153, %v1115
      %v1155 = vsel %vm447, %v1154, %v1119
      %v1156 = vsel %vm435, %v1065, %v1123
      %v1157 = vsel %vm437, %v1156, %v1127
      %v1158 = vsel %vm439, %v1157, %v1131
      %v1159 = vsel %vm441, %v1158, %v1135
      %v1160 = vsel %vm443, %v1159, %v1139
      %v1161 = vsel %vm445, %v1160, %v1143
      %v1162 = vsel %vm447, %v1161, %v1147
      %1163 = vrot.lane.b32.xlu0 %v931, 127
      %v1164 = vpop.permute.xlu0 %1163
      %1165 = vrot.lane.b32.xlu0 %v933, 127
      %v1166 = vpop.permute.xlu0 %1165
      %1167 = vrot.lane.b32.xlu0 %v936, 127
      %v1168 = vpop.permute.xlu0 %1167
      %1169 = vrot.lane.b32.xlu0 %v938, 127
      %v1170 = vpop.permute.xlu0 %1169
      %1171 = vrot.lane.b32.xlu0 %v941, 127
      %v1172 = vpop.permute.xlu0 %1171
      %1173 = vrot.lane.b32.xlu0 %v943, 127
      %v1174 = vpop.permute.xlu0 %1173
      %1175 = vrot.lane.b32.xlu0 %v946, 127
      %v1176 = vpop.permute.xlu0 %1175
      %1177 = vrot.lane.b32.xlu0 %v948, 127
      %v1178 = vpop.permute.xlu0 %1177
      %v1187 = vcombine.low %v1164, %v1172
      %v1188 = vcombine.high %v1164, %v1172
      %v1190 = vunpack.c.l.s4 1983009808
      %v1191 = vunpack.c.0.s8 %v1190
      %v1192 = vlaneseq
      %v1193 = vshrl.u32 %v1192, 7
      %v1194 = vsub.s32 %v1191, %v1193
      %v1195 = vrot.slane %v1187, %v1194
      %v1197 = vunpack.c.l.s4 1983009808
      %v1198 = vunpack.c.0.s8 %v1197
      %v1199 = vlaneseq
      %v1200 = vshrl.u32 %v1199, 7
      %v1201 = vsub.s32 %v1198, %v1200
      %v1202 = vrot.slane %v1188, %v1201
      %v1203 = vcombine.low %v1168, %v1176
      %v1204 = vcombine.high %v1168, %v1176
      %v1206 = vunpack.c.l.s4 1983009808
      %v1207 = vunpack.c.0.s8 %v1206
      %v1208 = vlaneseq
      %v1209 = vshrl.u32 %v1208, 7
      %v1210 = vsub.s32 %v1207, %v1209
      %v1211 = vrot.slane %v1203, %v1210
      %v1213 = vunpack.c.l.s4 1983009808
      %v1214 = vunpack.c.0.s8 %v1213
      %v1215 = vlaneseq
      %v1216 = vshrl.u32 %v1215, 7
      %v1217 = vsub.s32 %v1214, %v1216
      %v1218 = vrot.slane %v1204, %v1217
      %v1219 = vcombine.low %v1195, %v1211
      %v1220 = vcombine.high %v1195, %v1211
      %v1222 = vunpack.c.l.s4 1934713408
      %v1223 = vunpack.c.0.s8 %v1222
      %v1224 = vlaneseq
      %v1225 = vshrl.u32 %v1224, 7
      %v1226 = vsub.s32 %v1223, %v1225
      %v1227 = vrot.slane %v1219, %v1226
      %v1229 = vunpack.c.l.s4 1934713408
      %v1230 = vunpack.c.0.s8 %v1229
      %v1231 = vlaneseq
      %v1232 = vshrl.u32 %v1231, 7
      %v1233 = vsub.s32 %v1230, %v1232
      %v1234 = vrot.slane %v1220, %v1233
      %v1235 = vcombine.low %v1202, %v1218
      %v1236 = vcombine.high %v1202, %v1218
      %v1238 = vunpack.c.l.s4 1934713408
      %v1239 = vunpack.c.0.s8 %v1238
      %v1240 = vlaneseq
      %v1241 = vshrl.u32 %v1240, 7
      %v1242 = vsub.s32 %v1239, %v1241
      %v1243 = vrot.slane %v1235, %v1242
      %v1245 = vunpack.c.l.s4 1934713408
      %v1246 = vunpack.c.0.s8 %v1245
      %v1247 = vlaneseq
      %v1248 = vshrl.u32 %v1247, 7
      %v1249 = vsub.s32 %v1246, %v1248
      %v1250 = vrot.slane %v1236, %v1249
      %v1251 = vcombine.high %v1227, 0.0
      %v1252 = vcombine.high %v1234, 0.0
      %v1253 = vcombine.high %v1243, 0.0
      %v1254 = vcombine.high %v1250, 0.0
      %v1255 = vcombine.low %v1166, %v1174
      %v1256 = vcombine.high %v1166, %v1174
      %v1258 = vunpack.c.l.s4 1983009808
      %v1259 = vunpack.c.0.s8 %v1258
      %v1260 = vlaneseq
      %v1261 = vshrl.u32 %v1260, 7
      %v1262 = vsub.s32 %v1259, %v1261
      %v1263 = vrot.slane %v1255, %v1262
      %v1265 = vunpack.c.l.s4 1983009808
      %v1266 = vunpack.c.0.s8 %v1265
      %v1267 = vlaneseq
      %v1268 = vshrl.u32 %v1267, 7
      %v1269 = vsub.s32 %v1266, %v1268
      %v1270 = vrot.slane %v1256, %v1269
      %v1271 = vcombine.low %v1170, %v1178
      %v1272 = vcombine.high %v1170, %v1178
      %v1274 = vunpack.c.l.s4 1983009808
      %v1275 = vunpack.c.0.s8 %v1274
      %v1276 = vlaneseq
      %v1277 = vshrl.u32 %v1276, 7
      %v1278 = vsub.s32 %v1275, %v1277
      %v1279 = vrot.slane %v1271, %v1278
      %v1281 = vunpack.c.l.s4 1983009808
      %v1282 = vunpack.c.0.s8 %v1281
      %v1283 = vlaneseq
      %v1284 = vshrl.u32 %v1283, 7
      %v1285 = vsub.s32 %v1282, %v1284
      %v1286 = vrot.slane %v1272, %v1285
      %v1287 = vcombine.low %v1263, %v1279
      %v1288 = vcombine.high %v1263, %v1279
      %v1290 = vunpack.c.l.s4 1934713408
      %v1291 = vunpack.c.0.s8 %v1290
      %v1292 = vlaneseq
      %v1293 = vshrl.u32 %v1292, 7
      %v1294 = vsub.s32 %v1291, %v1293
      %v1295 = vrot.slane %v1287, %v1294
      %v1297 = vunpack.c.l.s4 1934713408
      %v1298 = vunpack.c.0.s8 %v1297
      %v1299 = vlaneseq
      %v1300 = vshrl.u32 %v1299, 7
      %v1301 = vsub.s32 %v1298, %v1300
      %v1302 = vrot.slane %v1288, %v1301
      %v1303 = vcombine.low %v1270, %v1286
      %v1304 = vcombine.high %v1270, %v1286
      %v1306 = vunpack.c.l.s4 1934713408
      %v1307 = vunpack.c.0.s8 %v1306
      %v1308 = vlaneseq
      %v1309 = vshrl.u32 %v1308, 7
      %v1310 = vsub.s32 %v1307, %v1309
      %v1311 = vrot.slane %v1303, %v1310
      %v1313 = vunpack.c.l.s4 1934713408
      %v1314 = vunpack.c.0.s8 %v1313
      %v1315 = vlaneseq
      %v1316 = vshrl.u32 %v1315, 7
      %v1317 = vsub.s32 %v1314, %v1316
      %v1318 = vrot.slane %v1304, %v1317
      %v1319 = vcombine.high %v1295, 0.0
      %v1320 = vcombine.high %v1302, 0.0
      %v1321 = vcombine.high %v1311, 0.0
      %v1322 = vcombine.high %v1318, 0.0
      %1324 = vrot.lane.b32.xlu0 %v1251, 16
      %v1325 = vpop.permute.xlu0 %1324
      %1328 = vrot.lane.b32.xlu0 %v1234, 32
      %v1329 = vpop.permute.xlu0 %1328
      %1332 = vrot.lane.b32.xlu0 %v1252, 48
      %v1333 = vpop.permute.xlu0 %1332
      %1336 = vrot.lane.b32.xlu0 %v1243, 64
      %v1337 = vpop.permute.xlu0 %1336
      %1340 = vrot.lane.b32.xlu0 %v1253, 80
      %v1341 = vpop.permute.xlu0 %1340
      %1344 = vrot.lane.b32.xlu0 %v1250, 96
      %v1345 = vpop.permute.xlu0 %1344
      %1348 = vrot.lane.b32.xlu0 %v1254, 112
      %v1349 = vpop.permute.xlu0 %1348
      %1352 = vrot.lane.b32.xlu0 %v1319, 16
      %v1353 = vpop.permute.xlu0 %1352
      %1356 = vrot.lane.b32.xlu0 %v1302, 32
      %v1357 = vpop.permute.xlu0 %1356
      %1360 = vrot.lane.b32.xlu0 %v1320, 48
      %v1361 = vpop.permute.xlu0 %1360
      %1364 = vrot.lane.b32.xlu0 %v1311, 64
      %v1365 = vpop.permute.xlu0 %1364
      %1368 = vrot.lane.b32.xlu0 %v1321, 80
      %v1369 = vpop.permute.xlu0 %1368
      %1372 = vrot.lane.b32.xlu0 %v1318, 96
      %v1373 = vpop.permute.xlu0 %1372
      %1376 = vrot.lane.b32.xlu0 %v1322, 112
      %v1377 = vpop.permute.xlu0 %1376
      %v1379 = vsel %vm435, %v1227, %v1325
      %v1380 = vsel %vm437, %v1379, %v1329
      %v1381 = vsel %vm439, %v1380, %v1333
      %v1382 = vsel %vm441, %v1381, %v1337
      %v1383 = vsel %vm443, %v1382, %v1341
      %v1384 = vsel %vm445, %v1383, %v1345
      %v1385 = vsel %vm447, %v1384, %v1349
      %v1386 = vsel %vm435, %v1295, %v1353
      %v1387 = vsel %vm437, %v1386, %v1357
      %v1388 = vsel %vm439, %v1387, %v1361
      %v1389 = vsel %vm441, %v1388, %v1365
      %v1390 = vsel %vm443, %v1389, %v1369
      %v1391 = vsel %vm445, %v1390, %v1373
      %v1392 = vsel %vm447, %v1391, %v1377
      %1393 = vrot.lane.b32.xlu0 %v931, 126
      %v1394 = vpop.permute.xlu0 %1393
      %1395 = vrot.lane.b32.xlu0 %v933, 126
      %v1396 = vpop.permute.xlu0 %1395
      %1397 = vrot.lane.b32.xlu0 %v936, 126
      %v1398 = vpop.permute.xlu0 %1397
      %1399 = vrot.lane.b32.xlu0 %v938, 126
      %v1400 = vpop.permute.xlu0 %1399
      %1401 = vrot.lane.b32.xlu0 %v941, 126
      %v1402 = vpop.permute.xlu0 %1401
      %1403 = vrot.lane.b32.xlu0 %v943, 126
      %v1404 = vpop.permute.xlu0 %1403
      %1405 = vrot.lane.b32.xlu0 %v946, 126
      %v1406 = vpop.permute.xlu0 %1405
      %1407 = vrot.lane.b32.xlu0 %v948, 126
      %v1408 = vpop.permute.xlu0 %1407
      %v1417 = vcombine.low %v1394, %v1402
      %v1418 = vcombine.high %v1394, %v1402
      %v1420 = vunpack.c.l.s4 1983009808
      %v1421 = vunpack.c.0.s8 %v1420
      %v1422 = vlaneseq
      %v1423 = vshrl.u32 %v1422, 7
      %v1424 = vsub.s32 %v1421, %v1423
      %v1425 = vrot.slane %v1417, %v1424
      %v1427 = vunpack.c.l.s4 1983009808
      %v1428 = vunpack.c.0.s8 %v1427
      %v1429 = vlaneseq
      %v1430 = vshrl.u32 %v1429, 7
      %v1431 = vsub.s32 %v1428, %v1430
      %v1432 = vrot.slane %v1418, %v1431
      %v1433 = vcombine.low %v1398, %v1406
      %v1434 = vcombine.high %v1398, %v1406
      %v1436 = vunpack.c.l.s4 1983009808
      %v1437 = vunpack.c.0.s8 %v1436
      %v1438 = vlaneseq
      %v1439 = vshrl.u32 %v1438, 7
      %v1440 = vsub.s32 %v1437, %v1439
      %v1441 = vrot.slane %v1433, %v1440
      %v1443 = vunpack.c.l.s4 1983009808
      %v1444 = vunpack.c.0.s8 %v1443
      %v1445 = vlaneseq
      %v1446 = vshrl.u32 %v1445, 7
      %v1447 = vsub.s32 %v1444, %v1446
      %v1448 = vrot.slane %v1434, %v1447
      %v1449 = vcombine.low %v1425, %v1441
      %v1450 = vcombine.high %v1425, %v1441
      %v1452 = vunpack.c.l.s4 1934713408
      %v1453 = vunpack.c.0.s8 %v1452
      %v1454 = vlaneseq
      %v1455 = vshrl.u32 %v1454, 7
      %v1456 = vsub.s32 %v1453, %v1455
      %v1457 = vrot.slane %v1449, %v1456
      %v1459 = vunpack.c.l.s4 1934713408
      %v1460 = vunpack.c.0.s8 %v1459
      %v1461 = vlaneseq
      %v1462 = vshrl.u32 %v1461, 7
      %v1463 = vsub.s32 %v1460, %v1462
      %v1464 = vrot.slane %v1450, %v1463
      %v1465 = vcombine.low %v1432, %v1448
      %v1466 = vcombine.high %v1432, %v1448
      %v1468 = vunpack.c.l.s4 1934713408
      %v1469 = vunpack.c.0.s8 %v1468
      %v1470 = vlaneseq
      %v1471 = vshrl.u32 %v1470, 7
      %v1472 = vsub.s32 %v1469, %v1471
      %v1473 = vrot.slane %v1465, %v1472
      %v1475 = vunpack.c.l.s4 1934713408
      %v1476 = vunpack.c.0.s8 %v1475
      %v1477 = vlaneseq
      %v1478 = vshrl.u32 %v1477, 7
      %v1479 = vsub.s32 %v1476, %v1478
      %v1480 = vrot.slane %v1466, %v1479
      %v1481 = vcombine.high %v1457, 0.0
      %v1482 = vcombine.high %v1464, 0.0
      %v1483 = vcombine.high %v1473, 0.0
      %v1484 = vcombine.high %v1480, 0.0
      %v1485 = vcombine.low %v1396, %v1404
      %v1486 = vcombine.high %v1396, %v1404
      %v1488 = vunpack.c.l.s4 1983009808
      %v1489 = vunpack.c.0.s8 %v1488
      %v1490 = vlaneseq
      %v1491 = vshrl.u32 %v1490, 7
      %v1492 = vsub.s32 %v1489, %v1491
      %v1493 = vrot.slane %v1485, %v1492
      %v1495 = vunpack.c.l.s4 1983009808
      %v1496 = vunpack.c.0.s8 %v1495
      %v1497 = vlaneseq
      %v1498 = vshrl.u32 %v1497, 7
      %v1499 = vsub.s32 %v1496, %v1498
      %v1500 = vrot.slane %v1486, %v1499
      %v1501 = vcombine.low %v1400, %v1408
      %v1502 = vcombine.high %v1400, %v1408
      %v1504 = vunpack.c.l.s4 1983009808
      %v1505 = vunpack.c.0.s8 %v1504
      %v1506 = vlaneseq
      %v1507 = vshrl.u32 %v1506, 7
      %v1508 = vsub.s32 %v1505, %v1507
      %v1509 = vrot.slane %v1501, %v1508
      %v1511 = vunpack.c.l.s4 1983009808
      %v1512 = vunpack.c.0.s8 %v1511
      %v1513 = vlaneseq
      %v1514 = vshrl.u32 %v1513, 7
      %v1515 = vsub.s32 %v1512, %v1514
      %v1516 = vrot.slane %v1502, %v1515
      %v1517 = vcombine.low %v1493, %v1509
      %v1518 = vcombine.high %v1493, %v1509
      %v1520 = vunpack.c.l.s4 1934713408
      %v1521 = vunpack.c.0.s8 %v1520
      %v1522 = vlaneseq
      %v1523 = vshrl.u32 %v1522, 7
      %v1524 = vsub.s32 %v1521, %v1523
      %v1525 = vrot.slane %v1517, %v1524
      %v1527 = vunpack.c.l.s4 1934713408
      %v1528 = vunpack.c.0.s8 %v1527
      %v1529 = vlaneseq
      %v1530 = vshrl.u32 %v1529, 7
      %v1531 = vsub.s32 %v1528, %v1530
      %v1532 = vrot.slane %v1518, %v1531
      %v1533 = vcombine.low %v1500, %v1516
      %v1534 = vcombine.high %v1500, %v1516
      %v1536 = vunpack.c.l.s4 1934713408
      %v1537 = vunpack.c.0.s8 %v1536
      %v1538 = vlaneseq
      %v1539 = vshrl.u32 %v1538, 7
      %v1540 = vsub.s32 %v1537, %v1539
      %v1541 = vrot.slane %v1533, %v1540
      %v1543 = vunpack.c.l.s4 1934713408
      %v1544 = vunpack.c.0.s8 %v1543
      %v1545 = vlaneseq
      %v1546 = vshrl.u32 %v1545, 7
      %v1547 = vsub.s32 %v1544, %v1546
      %v1548 = vrot.slane %v1534, %v1547
      %v1549 = vcombine.high %v1525, 0.0
      %v1550 = vcombine.high %v1532, 0.0
      %v1551 = vcombine.high %v1541, 0.0
      %v1552 = vcombine.high %v1548, 0.0
      %1554 = vrot.lane.b32.xlu0 %v1481, 16
      %v1555 = vpop.permute.xlu0 %1554
      %1558 = vrot.lane.b32.xlu0 %v1464, 32
      %v1559 = vpop.permute.xlu0 %1558
      %1562 = vrot.lane.b32.xlu0 %v1482, 48
      %v1563 = vpop.permute.xlu0 %1562
      %1566 = vrot.lane.b32.xlu0 %v1473, 64
      %v1567 = vpop.permute.xlu0 %1566
      %1570 = vrot.lane.b32.xlu0 %v1483, 80
      %v1571 = vpop.permute.xlu0 %1570
      %1574 = vrot.lane.b32.xlu0 %v1480, 96
      %v1575 = vpop.permute.xlu0 %1574
      %1578 = vrot.lane.b32.xlu0 %v1484, 112
      %v1579 = vpop.permute.xlu0 %1578
      %1582 = vrot.lane.b32.xlu0 %v1549, 16
      %v1583 = vpop.permute.xlu0 %1582
      %1586 = vrot.lane.b32.xlu0 %v1532, 32
      %v1587 = vpop.permute.xlu0 %1586
      %1590 = vrot.lane.b32.xlu0 %v1550, 48
      %v1591 = vpop.permute.xlu0 %1590
      %1594 = vrot.lane.b32.xlu0 %v1541, 64
      %v1595 = vpop.permute.xlu0 %1594
      %1598 = vrot.lane.b32.xlu0 %v1551, 80
      %v1599 = vpop.permute.xlu0 %1598
      %1602 = vrot.lane.b32.xlu0 %v1548, 96
      %v1603 = vpop.permute.xlu0 %1602
      %1606 = vrot.lane.b32.xlu0 %v1552, 112
      %v1607 = vpop.permute.xlu0 %1606
      %v1609 = vsel %vm435, %v1457, %v1555
      %v1610 = vsel %vm437, %v1609, %v1559
      %v1611 = vsel %vm439, %v1610, %v1563
      %v1612 = vsel %vm441, %v1611, %v1567
      %v1613 = vsel %vm443, %v1612, %v1571
      %v1614 = vsel %vm445, %v1613, %v1575
      %v1615 = vsel %vm447, %v1614, %v1579
      %v1616 = vsel %vm435, %v1525, %v1583
      %v1617 = vsel %vm437, %v1616, %v1587
      %v1618 = vsel %vm439, %v1617, %v1591
      %v1619 = vsel %vm441, %v1618, %v1595
      %v1620 = vsel %vm443, %v1619, %v1599
      %v1621 = vsel %vm445, %v1620, %v1603
      %v1622 = vsel %vm447, %v1621, %v1607
      %vm1623 = vcmask 1045504
      %v1624 = vrot.slane %v231, 2
      %v1625 = vrot.slane %v232, 2
      %v1626 = vsel %vm1623, %v1624, %v1625
      %v1627 = vrot.slane %v233, 2
      %v1628 = vsel %vm1623, %v1625, %v1627
      %v1629 = vrot.slane %v234, 2
      %v1630 = vrot.slane %v235, 2
      %v1631 = vsel %vm1623, %v1629, %v1630
      %v1632 = vrot.slane %v236, 2
      %v1633 = vsel %vm1623, %v1630, %v1632
      %v1634 = vrot.slane %v237, 2
      %v1635 = vrot.slane %v238, 2
      %v1636 = vsel %vm1623, %v1634, %v1635
      %v1637 = vrot.slane %v239, 2
      %v1638 = vsel %vm1623, %v1635, %v1637
      %v1639 = vrot.slane %v240, 2
      %v1640 = vrot.slane %v241, 2
      %v1641 = vsel %vm1623, %v1639, %v1640
      %v1642 = vrot.slane %v242, 2
      %v1643 = vsel %vm1623, %v1640, %v1642
      %v1652 = vcombine.low %v1626, %v1636
      %v1653 = vcombine.high %v1626, %v1636
      %v1655 = vunpack.c.l.s4 1983009808
      %v1656 = vunpack.c.0.s8 %v1655
      %v1657 = vlaneseq
      %v1658 = vshrl.u32 %v1657, 7
      %v1659 = vsub.s32 %v1656, %v1658
      %v1660 = vrot.slane %v1652, %v1659
      %v1662 = vunpack.c.l.s4 1983009808
      %v1663 = vunpack.c.0.s8 %v1662
      %v1664 = vlaneseq
      %v1665 = vshrl.u32 %v1664, 7
      %v1666 = vsub.s32 %v1663, %v1665
      %v1667 = vrot.slane %v1653, %v1666
      %v1668 = vcombine.low %v1631, %v1641
      %v1669 = vcombine.high %v1631, %v1641
      %v1671 = vunpack.c.l.s4 1983009808
      %v1672 = vunpack.c.0.s8 %v1671
      %v1673 = vlaneseq
      %v1674 = vshrl.u32 %v1673, 7
      %v1675 = vsub.s32 %v1672, %v1674
      %v1676 = vrot.slane %v1668, %v1675
      %v1678 = vunpack.c.l.s4 1983009808
      %v1679 = vunpack.c.0.s8 %v1678
      %v1680 = vlaneseq
      %v1681 = vshrl.u32 %v1680, 7
      %v1682 = vsub.s32 %v1679, %v1681
      %v1683 = vrot.slane %v1669, %v1682
      %v1684 = vcombine.low %v1660, %v1676
      %v1685 = vcombine.high %v1660, %v1676
      %v1687 = vunpack.c.l.s4 1934713408
      %v1688 = vunpack.c.0.s8 %v1687
      %v1689 = vlaneseq
      %v1690 = vshrl.u32 %v1689, 7
      %v1691 = vsub.s32 %v1688, %v1690
      %v1692 = vrot.slane %v1684, %v1691
      %v1694 = vunpack.c.l.s4 1934713408
      %v1695 = vunpack.c.0.s8 %v1694
      %v1696 = vlaneseq
      %v1697 = vshrl.u32 %v1696, 7
      %v1698 = vsub.s32 %v1695, %v1697
      %v1699 = vrot.slane %v1685, %v1698
      %v1700 = vcombine.low %v1667, %v1683
      %v1701 = vcombine.high %v1667, %v1683
      %v1703 = vunpack.c.l.s4 1934713408
      %v1704 = vunpack.c.0.s8 %v1703
      %v1705 = vlaneseq
      %v1706 = vshrl.u32 %v1705, 7
      %v1707 = vsub.s32 %v1704, %v1706
      %v1708 = vrot.slane %v1700, %v1707
      %v1710 = vunpack.c.l.s4 1934713408
      %v1711 = vunpack.c.0.s8 %v1710
      %v1712 = vlaneseq
      %v1713 = vshrl.u32 %v1712, 7
      %v1714 = vsub.s32 %v1711, %v1713
      %v1715 = vrot.slane %v1701, %v1714
      %v1716 = vcombine.high %v1692, 0.0
      %v1717 = vcombine.high %v1699, 0.0
      %v1718 = vcombine.high %v1708, 0.0
      %v1719 = vcombine.high %v1715, 0.0
      %v1720 = vcombine.low %v1628, %v1638
      %v1721 = vcombine.high %v1628, %v1638
      %v1723 = vunpack.c.l.s4 1983009808
      %v1724 = vunpack.c.0.s8 %v1723
      %v1725 = vlaneseq
      %v1726 = vshrl.u32 %v1725, 7
      %v1727 = vsub.s32 %v1724, %v1726
      %v1728 = vrot.slane %v1720, %v1727
      %v1730 = vunpack.c.l.s4 1983009808
      %v1731 = vunpack.c.0.s8 %v1730
      %v1732 = vlaneseq
      %v1733 = vshrl.u32 %v1732, 7
      %v1734 = vsub.s32 %v1731, %v1733
      %v1735 = vrot.slane %v1721, %v1734
      %v1736 = vcombine.low %v1633, %v1643
      %v1737 = vcombine.high %v1633, %v1643
      %v1739 = vunpack.c.l.s4 1983009808
      %v1740 = vunpack.c.0.s8 %v1739
      %v1741 = vlaneseq
      %v1742 = vshrl.u32 %v1741, 7
      %v1743 = vsub.s32 %v1740, %v1742
      %v1744 = vrot.slane %v1736, %v1743
      %v1746 = vunpack.c.l.s4 1983009808
      %v1747 = vunpack.c.0.s8 %v1746
      %v1748 = vlaneseq
      %v1749 = vshrl.u32 %v1748, 7
      %v1750 = vsub.s32 %v1747, %v1749
      %v1751 = vrot.slane %v1737, %v1750
      %v1752 = vcombine.low %v1728, %v1744
      %v1753 = vcombine.high %v1728, %v1744
      %v1755 = vunpack.c.l.s4 1934713408
      %v1756 = vunpack.c.0.s8 %v1755
      %v1757 = vlaneseq
      %v1758 = vshrl.u32 %v1757, 7
      %v1759 = vsub.s32 %v1756, %v1758
      %v1760 = vrot.slane %v1752, %v1759
      %v1762 = vunpack.c.l.s4 1934713408
      %v1763 = vunpack.c.0.s8 %v1762
      %v1764 = vlaneseq
      %v1765 = vshrl.u32 %v1764, 7
      %v1766 = vsub.s32 %v1763, %v1765
      %v1767 = vrot.slane %v1753, %v1766
      %v1768 = vcombine.low %v1735, %v1751
      %v1769 = vcombine.high %v1735, %v1751
      %v1771 = vunpack.c.l.s4 1934713408
      %v1772 = vunpack.c.0.s8 %v1771
      %v1773 = vlaneseq
      %v1774 = vshrl.u32 %v1773, 7
      %v1775 = vsub.s32 %v1772, %v1774
      %v1776 = vrot.slane %v1768, %v1775
      %v1778 = vunpack.c.l.s4 1934713408
      %v1779 = vunpack.c.0.s8 %v1778
      %v1780 = vlaneseq
      %v1781 = vshrl.u32 %v1780, 7
      %v1782 = vsub.s32 %v1779, %v1781
      %v1783 = vrot.slane %v1769, %v1782
      %v1784 = vcombine.high %v1760, 0.0
      %v1785 = vcombine.high %v1767, 0.0
      %v1786 = vcombine.high %v1776, 0.0
      %v1787 = vcombine.high %v1783, 0.0
      %1789 = vrot.lane.b32.xlu0 %v1716, 16
      %v1790 = vpop.permute.xlu0 %1789
      %1793 = vrot.lane.b32.xlu0 %v1699, 32
      %v1794 = vpop.permute.xlu0 %1793
      %1797 = vrot.lane.b32.xlu0 %v1717, 48
      %v1798 = vpop.permute.xlu0 %1797
      %1801 = vrot.lane.b32.xlu0 %v1708, 64
      %v1802 = vpop.permute.xlu0 %1801
      %1805 = vrot.lane.b32.xlu0 %v1718, 80
      %v1806 = vpop.permute.xlu0 %1805
      %1809 = vrot.lane.b32.xlu0 %v1715, 96
      %v1810 = vpop.permute.xlu0 %1809
      %1813 = vrot.lane.b32.xlu0 %v1719, 112
      %v1814 = vpop.permute.xlu0 %1813
      %1817 = vrot.lane.b32.xlu0 %v1784, 16
      %v1818 = vpop.permute.xlu0 %1817
      %1821 = vrot.lane.b32.xlu0 %v1767, 32
      %v1822 = vpop.permute.xlu0 %1821
      %1825 = vrot.lane.b32.xlu0 %v1785, 48
      %v1826 = vpop.permute.xlu0 %1825
      %1829 = vrot.lane.b32.xlu0 %v1776, 64
      %v1830 = vpop.permute.xlu0 %1829
      %1833 = vrot.lane.b32.xlu0 %v1786, 80
      %v1834 = vpop.permute.xlu0 %1833
      %1837 = vrot.lane.b32.xlu0 %v1783, 96
      %v1838 = vpop.permute.xlu0 %1837
      %1841 = vrot.lane.b32.xlu0 %v1787, 112
      %v1842 = vpop.permute.xlu0 %1841
      %v1844 = vsel %vm435, %v1692, %v1790
      %v1845 = vsel %vm437, %v1844, %v1794
      %v1846 = vsel %vm439, %v1845, %v1798
      %v1847 = vsel %vm441, %v1846, %v1802
      %v1848 = vsel %vm443, %v1847, %v1806
      %v1849 = vsel %vm445, %v1848, %v1810
      %v1850 = vsel %vm447, %v1849, %v1814
      %v1851 = vsel %vm435, %v1760, %v1818
      %v1852 = vsel %vm437, %v1851, %v1822
      %v1853 = vsel %vm439, %v1852, %v1826
      %v1854 = vsel %vm441, %v1853, %v1830
      %v1855 = vsel %vm443, %v1854, %v1834
      %v1856 = vsel %vm445, %v1855, %v1838
      %v1857 = vsel %vm447, %v1856, %v1842
      %1858 = vrot.lane.b32.xlu0 %v1626, 127
      %v1859 = vpop.permute.xlu0 %1858
      %1860 = vrot.lane.b32.xlu0 %v1628, 127
      %v1861 = vpop.permute.xlu0 %1860
      %1862 = vrot.lane.b32.xlu0 %v1631, 127
      %v1863 = vpop.permute.xlu0 %1862
      %1864 = vrot.lane.b32.xlu0 %v1633, 127
      %v1865 = vpop.permute.xlu0 %1864
      %1866 = vrot.lane.b32.xlu0 %v1636, 127
      %v1867 = vpop.permute.xlu0 %1866
      %1868 = vrot.lane.b32.xlu0 %v1638, 127
      %v1869 = vpop.permute.xlu0 %1868
      %1870 = vrot.lane.b32.xlu0 %v1641, 127
      %v1871 = vpop.permute.xlu0 %1870
      %1872 = vrot.lane.b32.xlu0 %v1643, 127
      %v1873 = vpop.permute.xlu0 %1872
      %v1882 = vcombine.low %v1859, %v1867
      %v1883 = vcombine.high %v1859, %v1867
      %v1885 = vunpack.c.l.s4 1983009808
      %v1886 = vunpack.c.0.s8 %v1885
      %v1887 = vlaneseq
      %v1888 = vshrl.u32 %v1887, 7
      %v1889 = vsub.s32 %v1886, %v1888
      %v1890 = vrot.slane %v1882, %v1889
      %v1892 = vunpack.c.l.s4 1983009808
      %v1893 = vunpack.c.0.s8 %v1892
      %v1894 = vlaneseq
      %v1895 = vshrl.u32 %v1894, 7
      %v1896 = vsub.s32 %v1893, %v1895
      %v1897 = vrot.slane %v1883, %v1896
      %v1898 = vcombine.low %v1863, %v1871
      %v1899 = vcombine.high %v1863, %v1871
      %v1901 = vunpack.c.l.s4 1983009808
      %v1902 = vunpack.c.0.s8 %v1901
      %v1903 = vlaneseq
      %v1904 = vshrl.u32 %v1903, 7
      %v1905 = vsub.s32 %v1902, %v1904
      %v1906 = vrot.slane %v1898, %v1905
      %v1908 = vunpack.c.l.s4 1983009808
      %v1909 = vunpack.c.0.s8 %v1908
      %v1910 = vlaneseq
      %v1911 = vshrl.u32 %v1910, 7
      %v1912 = vsub.s32 %v1909, %v1911
      %v1913 = vrot.slane %v1899, %v1912
      %v1914 = vcombine.low %v1890, %v1906
      %v1915 = vcombine.high %v1890, %v1906
      %v1917 = vunpack.c.l.s4 1934713408
      %v1918 = vunpack.c.0.s8 %v1917
      %v1919 = vlaneseq
      %v1920 = vshrl.u32 %v1919, 7
      %v1921 = vsub.s32 %v1918, %v1920
      %v1922 = vrot.slane %v1914, %v1921
      %v1924 = vunpack.c.l.s4 1934713408
      %v1925 = vunpack.c.0.s8 %v1924
      %v1926 = vlaneseq
      %v1927 = vshrl.u32 %v1926, 7
      %v1928 = vsub.s32 %v1925, %v1927
      %v1929 = vrot.slane %v1915, %v1928
      %v1930 = vcombine.low %v1897, %v1913
      %v1931 = vcombine.high %v1897, %v1913
      %v1933 = vunpack.c.l.s4 1934713408
      %v1934 = vunpack.c.0.s8 %v1933
      %v1935 = vlaneseq
      %v1936 = vshrl.u32 %v1935, 7
      %v1937 = vsub.s32 %v1934, %v1936
      %v1938 = vrot.slane %v1930, %v1937
      %v1940 = vunpack.c.l.s4 1934713408
      %v1941 = vunpack.c.0.s8 %v1940
      %v1942 = vlaneseq
      %v1943 = vshrl.u32 %v1942, 7
      %v1944 = vsub.s32 %v1941, %v1943
      %v1945 = vrot.slane %v1931, %v1944
      %v1946 = vcombine.high %v1922, 0.0
      %v1947 = vcombine.high %v1929, 0.0
      %v1948 = vcombine.high %v1938, 0.0
      %v1949 = vcombine.high %v1945, 0.0
      %v1950 = vcombine.low %v1861, %v1869
      %v1951 = vcombine.high %v1861, %v1869
      %v1953 = vunpack.c.l.s4 1983009808
      %v1954 = vunpack.c.0.s8 %v1953
      %v1955 = vlaneseq
      %v1956 = vshrl.u32 %v1955, 7
      %v1957 = vsub.s32 %v1954, %v1956
      %v1958 = vrot.slane %v1950, %v1957
      %v1960 = vunpack.c.l.s4 1983009808
      %v1961 = vunpack.c.0.s8 %v1960
      %v1962 = vlaneseq
      %v1963 = vshrl.u32 %v1962, 7
      %v1964 = vsub.s32 %v1961, %v1963
      %v1965 = vrot.slane %v1951, %v1964
      %v1966 = vcombine.low %v1865, %v1873
      %v1967 = vcombine.high %v1865, %v1873
      %v1969 = vunpack.c.l.s4 1983009808
      %v1970 = vunpack.c.0.s8 %v1969
      %v1971 = vlaneseq
      %v1972 = vshrl.u32 %v1971, 7
      %v1973 = vsub.s32 %v1970, %v1972
      %v1974 = vrot.slane %v1966, %v1973
      %v1976 = vunpack.c.l.s4 1983009808
      %v1977 = vunpack.c.0.s8 %v1976
      %v1978 = vlaneseq
      %v1979 = vshrl.u32 %v1978, 7
      %v1980 = vsub.s32 %v1977, %v1979
      %v1981 = vrot.slane %v1967, %v1980
      %v1982 = vcombine.low %v1958, %v1974
      %v1983 = vcombine.high %v1958, %v1974
      %v1985 = vunpack.c.l.s4 1934713408
      %v1986 = vunpack.c.0.s8 %v1985
      %v1987 = vlaneseq
      %v1988 = vshrl.u32 %v1987, 7
      %v1989 = vsub.s32 %v1986, %v1988
      %v1990 = vrot.slane %v1982, %v1989
      %v1992 = vunpack.c.l.s4 1934713408
      %v1993 = vunpack.c.0.s8 %v1992
      %v1994 = vlaneseq
      %v1995 = vshrl.u32 %v1994, 7
      %v1996 = vsub.s32 %v1993, %v1995
      %v1997 = vrot.slane %v1983, %v1996
      %v1998 = vcombine.low %v1965, %v1981
      %v1999 = vcombine.high %v1965, %v1981
      %v2001 = vunpack.c.l.s4 1934713408
      %v2002 = vunpack.c.0.s8 %v2001
      %v2003 = vlaneseq
      %v2004 = vshrl.u32 %v2003, 7
      %v2005 = vsub.s32 %v2002, %v2004
      %v2006 = vrot.slane %v1998, %v2005
      %v2008 = vunpack.c.l.s4 1934713408
      %v2009 = vunpack.c.0.s8 %v2008
      %v2010 = vlaneseq
      %v2011 = vshrl.u32 %v2010, 7
      %v2012 = vsub.s32 %v2009, %v2011
      %v2013 = vrot.slane %v1999, %v2012
      %v2014 = vcombine.high %v1990, 0.0
      %v2015 = vcombine.high %v1997, 0.0
      %v2016 = vcombine.high %v2006, 0.0
      %v2017 = vcombine.high %v2013, 0.0
      %2019 = vrot.lane.b32.xlu0 %v1946, 16
      %v2020 = vpop.permute.xlu0 %2019
      %2023 = vrot.lane.b32.xlu0 %v1929, 32
      %v2024 = vpop.permute.xlu0 %2023
      %2027 = vrot.lane.b32.xlu0 %v1947, 48
      %v2028 = vpop.permute.xlu0 %2027
      %2031 = vrot.lane.b32.xlu0 %v1938, 64
      %v2032 = vpop.permute.xlu0 %2031
      %2035 = vrot.lane.b32.xlu0 %v1948, 80
      %v2036 = vpop.permute.xlu0 %2035
      %2039 = vrot.lane.b32.xlu0 %v1945, 96
      %v2040 = vpop.permute.xlu0 %2039
      %2043 = vrot.lane.b32.xlu0 %v1949, 112
      %v2044 = vpop.permute.xlu0 %2043
      %2047 = vrot.lane.b32.xlu0 %v2014, 16
      %v2048 = vpop.permute.xlu0 %2047
      %2051 = vrot.lane.b32.xlu0 %v1997, 32
      %v2052 = vpop.permute.xlu0 %2051
      %2055 = vrot.lane.b32.xlu0 %v2015, 48
      %v2056 = vpop.permute.xlu0 %2055
      %2059 = vrot.lane.b32.xlu0 %v2006, 64
      %v2060 = vpop.permute.xlu0 %2059
      %2063 = vrot.lane.b32.xlu0 %v2016, 80
      %v2064 = vpop.permute.xlu0 %2063
      %2067 = vrot.lane.b32.xlu0 %v2013, 96
      %v2068 = vpop.permute.xlu0 %2067
      %2071 = vrot.lane.b32.xlu0 %v2017, 112
      %v2072 = vpop.permute.xlu0 %2071
      %v2074 = vsel %vm435, %v1922, %v2020
      %v2075 = vsel %vm437, %v2074, %v2024
      %v2076 = vsel %vm439, %v2075, %v2028
      %v2077 = vsel %vm441, %v2076, %v2032
      %v2078 = vsel %vm443, %v2077, %v2036
      %v2079 = vsel %vm445, %v2078, %v2040
      %v2080 = vsel %vm447, %v2079, %v2044
      %v2081 = vsel %vm435, %v1990, %v2048
      %v2082 = vsel %vm437, %v2081, %v2052
      %v2083 = vsel %vm439, %v2082, %v2056
      %v2084 = vsel %vm441, %v2083, %v2060
      %v2085 = vsel %vm443, %v2084, %v2064
      %v2086 = vsel %vm445, %v2085, %v2068
      %v2087 = vsel %vm447, %v2086, %v2072
      %2088 = vrot.lane.b32.xlu0 %v1626, 126
      %v2089 = vpop.permute.xlu0 %2088
      %2090 = vrot.lane.b32.xlu0 %v1628, 126
      %v2091 = vpop.permute.xlu0 %2090
      %2092 = vrot.lane.b32.xlu0 %v1631, 126
      %v2093 = vpop.permute.xlu0 %2092
      %2094 = vrot.lane.b32.xlu0 %v1633, 126
      %v2095 = vpop.permute.xlu0 %2094
      %2096 = vrot.lane.b32.xlu0 %v1636, 126
      %v2097 = vpop.permute.xlu0 %2096
      %2098 = vrot.lane.b32.xlu0 %v1638, 126
      %v2099 = vpop.permute.xlu0 %2098
      %2100 = vrot.lane.b32.xlu0 %v1641, 126
      %v2101 = vpop.permute.xlu0 %2100
      %2102 = vrot.lane.b32.xlu0 %v1643, 126
      %v2103 = vpop.permute.xlu0 %2102
      %v2112 = vcombine.low %v2089, %v2097
      %v2113 = vcombine.high %v2089, %v2097
      %v2115 = vunpack.c.l.s4 1983009808
      %v2116 = vunpack.c.0.s8 %v2115
      %v2117 = vlaneseq
      %v2118 = vshrl.u32 %v2117, 7
      %v2119 = vsub.s32 %v2116, %v2118
      %v2120 = vrot.slane %v2112, %v2119
      %v2122 = vunpack.c.l.s4 1983009808
      %v2123 = vunpack.c.0.s8 %v2122
      %v2124 = vlaneseq
      %v2125 = vshrl.u32 %v2124, 7
      %v2126 = vsub.s32 %v2123, %v2125
      %v2127 = vrot.slane %v2113, %v2126
      %v2128 = vcombine.low %v2093, %v2101
      %v2129 = vcombine.high %v2093, %v2101
      %v2131 = vunpack.c.l.s4 1983009808
      %v2132 = vunpack.c.0.s8 %v2131
      %v2133 = vlaneseq
      %v2134 = vshrl.u32 %v2133, 7
      %v2135 = vsub.s32 %v2132, %v2134
      %v2136 = vrot.slane %v2128, %v2135
      %v2138 = vunpack.c.l.s4 1983009808
      %v2139 = vunpack.c.0.s8 %v2138
      %v2140 = vlaneseq
      %v2141 = vshrl.u32 %v2140, 7
      %v2142 = vsub.s32 %v2139, %v2141
      %v2143 = vrot.slane %v2129, %v2142
      %v2144 = vcombine.low %v2120, %v2136
      %v2145 = vcombine.high %v2120, %v2136
      %v2147 = vunpack.c.l.s4 1934713408
      %v2148 = vunpack.c.0.s8 %v2147
      %v2149 = vlaneseq
      %v2150 = vshrl.u32 %v2149, 7
      %v2151 = vsub.s32 %v2148, %v2150
      %v2152 = vrot.slane %v2144, %v2151
      %v2154 = vunpack.c.l.s4 1934713408
      %v2155 = vunpack.c.0.s8 %v2154
      %v2156 = vlaneseq
      %v2157 = vshrl.u32 %v2156, 7
      %v2158 = vsub.s32 %v2155, %v2157
      %v2159 = vrot.slane %v2145, %v2158
      %v2160 = vcombine.low %v2127, %v2143
      %v2161 = vcombine.high %v2127, %v2143
      %v2163 = vunpack.c.l.s4 1934713408
      %v2164 = vunpack.c.0.s8 %v2163
      %v2165 = vlaneseq
      %v2166 = vshrl.u32 %v2165, 7
      %v2167 = vsub.s32 %v2164, %v2166
      %v2168 = vrot.slane %v2160, %v2167
      %v2170 = vunpack.c.l.s4 1934713408
      %v2171 = vunpack.c.0.s8 %v2170
      %v2172 = vlaneseq
      %v2173 = vshrl.u32 %v2172, 7
      %v2174 = vsub.s32 %v2171, %v2173
      %v2175 = vrot.slane %v2161, %v2174
      %v2176 = vcombine.high %v2152, 0.0
      %v2177 = vcombine.high %v2159, 0.0
      %v2178 = vcombine.high %v2168, 0.0
      %v2179 = vcombine.high %v2175, 0.0
      %v2180 = vcombine.low %v2091, %v2099
      %v2181 = vcombine.high %v2091, %v2099
      %v2183 = vunpack.c.l.s4 1983009808
      %v2184 = vunpack.c.0.s8 %v2183
      %v2185 = vlaneseq
      %v2186 = vshrl.u32 %v2185, 7
      %v2187 = vsub.s32 %v2184, %v2186
      %v2188 = vrot.slane %v2180, %v2187
      %v2190 = vunpack.c.l.s4 1983009808
      %v2191 = vunpack.c.0.s8 %v2190
      %v2192 = vlaneseq
      %v2193 = vshrl.u32 %v2192, 7
      %v2194 = vsub.s32 %v2191, %v2193
      %v2195 = vrot.slane %v2181, %v2194
      %v2196 = vcombine.low %v2095, %v2103
      %v2197 = vcombine.high %v2095, %v2103
      %v2199 = vunpack.c.l.s4 1983009808
      %v2200 = vunpack.c.0.s8 %v2199
      %v2201 = vlaneseq
      %v2202 = vshrl.u32 %v2201, 7
      %v2203 = vsub.s32 %v2200, %v2202
      %v2204 = vrot.slane %v2196, %v2203
      %v2206 = vunpack.c.l.s4 1983009808
      %v2207 = vunpack.c.0.s8 %v2206
      %v2208 = vlaneseq
      %v2209 = vshrl.u32 %v2208, 7
      %v2210 = vsub.s32 %v2207, %v2209
      %v2211 = vrot.slane %v2197, %v2210
      %v2212 = vcombine.low %v2188, %v2204
      %v2213 = vcombine.high %v2188, %v2204
      %v2215 = vunpack.c.l.s4 1934713408
      %v2216 = vunpack.c.0.s8 %v2215
      %v2217 = vlaneseq
      %v2218 = vshrl.u32 %v2217, 7
      %v2219 = vsub.s32 %v2216, %v2218
      %v2220 = vrot.slane %v2212, %v2219
      %v2222 = vunpack.c.l.s4 1934713408
      %v2223 = vunpack.c.0.s8 %v2222
      %v2224 = vlaneseq
      %v2225 = vshrl.u32 %v2224, 7
      %v2226 = vsub.s32 %v2223, %v2225
      %v2227 = vrot.slane %v2213, %v2226
      %v2228 = vcombine.low %v2195, %v2211
      %v2229 = vcombine.high %v2195, %v2211
      %v2231 = vunpack.c.l.s4 1934713408
      %v2232 = vunpack.c.0.s8 %v2231
      %v2233 = vlaneseq
      %v2234 = vshrl.u32 %v2233, 7
      %v2235 = vsub.s32 %v2232, %v2234
      %v2236 = vrot.slane %v2228, %v2235
      %v2238 = vunpack.c.l.s4 1934713408
      %v2239 = vunpack.c.0.s8 %v2238
      %v2240 = vlaneseq
      %v2241 = vshrl.u32 %v2240, 7
      %v2242 = vsub.s32 %v2239, %v2241
      %v2243 = vrot.slane %v2229, %v2242
      %v2244 = vcombine.high %v2220, 0.0
      %v2245 = vcombine.high %v2227, 0.0
      %v2246 = vcombine.high %v2236, 0.0
      %v2247 = vcombine.high %v2243, 0.0
      %2249 = vrot.lane.b32.xlu0 %v2176, 16
      %v2250 = vpop.permute.xlu0 %2249
      %2253 = vrot.lane.b32.xlu0 %v2159, 32
      %v2254 = vpop.permute.xlu0 %2253
      %2257 = vrot.lane.b32.xlu0 %v2177, 48
      %v2258 = vpop.permute.xlu0 %2257
      %2261 = vrot.lane.b32.xlu0 %v2168, 64
      %v2262 = vpop.permute.xlu0 %2261
      %2265 = vrot.lane.b32.xlu0 %v2178, 80
      %v2266 = vpop.permute.xlu0 %2265
      %2269 = vrot.lane.b32.xlu0 %v2175, 96
      %v2270 = vpop.permute.xlu0 %2269
      %2273 = vrot.lane.b32.xlu0 %v2179, 112
      %v2274 = vpop.permute.xlu0 %2273
      %2277 = vrot.lane.b32.xlu0 %v2244, 16
      %v2278 = vpop.permute.xlu0 %2277
      %2281 = vrot.lane.b32.xlu0 %v2227, 32
      %v2282 = vpop.permute.xlu0 %2281
      %2285 = vrot.lane.b32.xlu0 %v2245, 48
      %v2286 = vpop.permute.xlu0 %2285
      %2289 = vrot.lane.b32.xlu0 %v2236, 64
      %v2290 = vpop.permute.xlu0 %2289
      %2293 = vrot.lane.b32.xlu0 %v2246, 80
      %v2294 = vpop.permute.xlu0 %2293
      %2297 = vrot.lane.b32.xlu0 %v2243, 96
      %v2298 = vpop.permute.xlu0 %2297
      %2301 = vrot.lane.b32.xlu0 %v2247, 112
      %v2302 = vpop.permute.xlu0 %2301
      %v2304 = vsel %vm435, %v2152, %v2250
      %v2305 = vsel %vm437, %v2304, %v2254
      %v2306 = vsel %vm439, %v2305, %v2258
      %v2307 = vsel %vm441, %v2306, %v2262
      %v2308 = vsel %vm443, %v2307, %v2266
      %v2309 = vsel %vm445, %v2308, %v2270
      %v2310 = vsel %vm447, %v2309, %v2274
      %v2311 = vsel %vm435, %v2220, %v2278
      %v2312 = vsel %vm437, %v2311, %v2282
      %v2313 = vsel %vm439, %v2312, %v2286
      %v2314 = vsel %vm441, %v2313, %v2290
      %v2315 = vsel %vm443, %v2314, %v2294
      %v2316 = vsel %vm445, %v2315, %v2298
      %v2317 = vsel %vm447, %v2316, %v2302
      %v2320 = vrot.slane %v686, 4
      %v2321 = vrot.slane %v693, 4
      %v2326 = vrot.slane %v1155, 4
      %v2327 = vrot.slane %v1162, 4
      %v2332 = vrot.slane %v1615, 4
      %v2333 = vrot.slane %v1622, 4
      %v2338 = vrot.slane %v2080, 4
      %v2339 = vrot.slane %v2087, 4
      %vm2342 = vcmask 1043456
      %v2343 = vsel %vm2342, %v448, %v2320
      %v2344 = vsel %vm2342, %v455, %v2321
      %v2345 = vsel %vm2342, %v916, %v2326
      %v2346 = vsel %vm2342, %v923, %v2327
      %v2347 = vsel %vm2342, %v1385, %v2332
      %v2348 = vsel %vm2342, %v1392, %v2333
      %v2349 = vsel %vm2342, %v1850, %v2338
      %v2350 = vsel %vm2342, %v1857, %v2339
      %v2351 = vld [vmem:[%s1] sm:$0xff]
      %v2352 = vld [vmem:[%s1 + $0x8] sm:$0xff]
      %v2353 = vld [vmem:[%s1 + $0x10] sm:$0xff]
      %v2354 = vld [vmem:[%s1 + $0x18] sm:$0xff]
      %vm2355 = vcmask 293888
      %v2357 = vsel %vm2355, %v2351, 0
      %v2360 = vsel %vm2355, %v2352, 0
      %v2363 = vsel %vm2355, %v2353, 0
      %v2366 = vsel %vm2355, %v2354, 0
      %v2369 = vsel %vm2342, %v2310, 0
      %v2372 = vsel %vm2342, %v2317, 0
      %2374 = vmatprep.subr.mxu0 0.0
      %2375 = vmatpush1.msra.mxu0 0.0
      %2376 = vmatprep.subr.mxu0 0.0
      %2377 = vmatpush1.msra.mxu0 0.0
      %2378 = vmatprep.subr.mxu0 0.0
      %2379 = vmatpush1.msra.mxu0 0.0
      %2380 = vmatprep.subr.mxu0 0.0
      %2381 = vmatpush1.msra.mxu0 0.0
      %2382 = vmatprep.subr.mxu0 0.0
      %2383 = vmatpush1.msra.mxu0 0.0
      %2384 = vmatprep.subr.mxu0 0.0
      %2385 = vmatpush1.msra.mxu0 0.0
      %2386 = vmatprep.subr.mxu0 0.0
      %2387 = vmatpush1.msra.mxu0 0.0
      %2388 = vmatprep.subr.mxu0 0.0
      %2389 = vmatpush1.msra.mxu0 0.0
      %2390 = vmatprep.subr.mxu0 0.0
      %2391 = vmatpush1.msra.mxu0 0.0
      %2392 = vmatprep.subr.mxu0 0.0
      %2393 = vmatpush1.msra.mxu0 0.0
      %2394 = vmatprep.subr.mxu0 0.0
      %2395 = vmatpush1.msra.mxu0 0.0
      %2396 = vmatprep.subr.mxu0 %v2372
      %2397 = vmatpush1.msra.mxu0 %v2369
      %2398 = vmatprep.subr.mxu0 %v2350
      %2399 = vmatpush1.msra.mxu0 %v2349
      %2400 = vmatprep.subr.mxu0 %v2348
      %2401 = vmatpush1.msra.mxu0 %v2347
      %2402 = vmatprep.subr.mxu0 %v2346
      %2403 = vmatpush1.msra.mxu0 %v2345
      %2404 = vmatprep.subr.mxu0 %v2344
      %2405 = vmatpush1.msra.mxu0 %v2343
      %2406 = vmatprep.subr.mxu0 0.0
      %2407 = vmatpush2.msra.mxu0 0.0
      %2408 = vmatprep.subr.mxu0 0.0
      %2409 = vmatpush2.msra.mxu0 0.0
      %2410 = vmatprep.subr.mxu0 0.0
      %2411 = vmatpush2.msra.mxu0 0.0
      %2412 = vmatprep.subr.mxu0 0.0
      %2413 = vmatpush2.msra.mxu0 0.0
      %2414 = vmatprep.subr.mxu0 0.0
      %2415 = vmatpush2.msra.mxu0 0.0
      %2416 = vmatprep.subr.mxu0 0.0
      %2417 = vmatpush2.msra.mxu0 0.0
      %2418 = vmatprep.subr.mxu0 0.0
      %2419 = vmatpush2.msra.mxu0 0.0
      %2420 = vmatprep.subr.mxu0 0.0
      %2421 = vmatpush2.msra.mxu0 0.0
      %2422 = vmatprep.subr.mxu0 0.0
      %2423 = vmatpush2.msra.mxu0 0.0
      %2424 = vmatprep.subr.mxu0 0.0
      %2425 = vmatpush2.msra.mxu0 0.0
      %2426 = vmatprep.subr.mxu0 0.0
      %2427 = vmatpush2.msra.mxu0 0.0
      %2428 = vmatprep.subr.mxu0 0.0
      %2429 = vmatpush2.msra.mxu0 0.0
      %2430 = vmatprep.subr.mxu0 0.0
      %2431 = vmatpush2.msra.mxu0 0.0
      %2432 = vmatprep.subr.mxu0 0.0
      %2433 = vmatpush2.msra.mxu0 0.0
      %2434 = vmatprep.subr.mxu0 0.0
      %2435 = vmatpush2.msra.mxu0 0.0
      %2436 = vmatprep.subr.mxu0 0.0
      %2437 = vmatpush2.msra.mxu0 0.0
      %2438 = vmatprep.mubr.f32.mxu0 0.0
      %2439 = vmatmul.mubr.f32.gmra.mxu0 %v2357
      %v2440 = vpop.f32.mrf.mxu0
      %v2441 = vadd.f32 0.0, %v2440
      %v2442 = vpop.f32.mrf.mxu0
      %v2443 = vadd.f32 0.0, %v2442
      %2444 = vmatprep.mubr.f32.mxu0 0.0
      %2445 = vmatmul.mubr.f32.gmra.mxu0 %v2360
      %v2446 = vpop.f32.mrf.mxu0
      %v2447 = vadd.f32 0.0, %v2446
      %v2448 = vpop.f32.mrf.mxu0
      %v2449 = vadd.f32 0.0, %v2448
      %2450 = vmatprep.mubr.f32.mxu0 0.0
      %2451 = vmatmul.mubr.f32.gmra.mxu0 %v2363
      %v2452 = vpop.f32.mrf.mxu0
      %v2453 = vadd.f32 0.0, %v2452
      %v2454 = vpop.f32.mrf.mxu0
      %v2455 = vadd.f32 0.0, %v2454
      %2456 = vmatprep.mubr.f32.mxu0 0.0
      %2457 = vmatmul.mubr.f32.gmra.mxu0 %v2366
      %v2458 = vpop.f32.mrf.mxu0
      %v2459 = vadd.f32 0.0, %v2458
      %v2460 = vpop.f32.mrf.mxu0
      %v2461 = vadd.f32 0.0, %v2460
      %2462 = vdwg.mxu0
      %2463 = vst [vmem:[%s220] sm:$0xff] %v2441
      %2464 = vst [vmem:[%s220 + $0x8] sm:$0xff] %v2443
      %2465 = vst [vmem:[%s220 + $0x10] sm:$0xff] %v2447
      %2466 = vst [vmem:[%s220 + $0x18] sm:$0xff] %v2449
      %2467 = vst [vmem:[%s220 + $0x20] sm:$0xff] %v2453
      %2468 = vst [vmem:[%s220 + $0x28] sm:$0xff] %v2455
      %2469 = vst [vmem:[%s220 + $0x30] sm:$0xff] %v2459
      %2470 = vst [vmem:[%s220 + $0x38] sm:$0xff] %v2461
      %v2471 = vadd.f32 %v2441, %v2443
      %2472 = vadd.xlane.f32.xlu0 %v2471
      %v2473 = vpop.xlane.xlu0 %2472
      %v2474 = vadd.f32 %v2447, %v2449
      %2475 = vadd.xlane.f32.xlu0 %v2474
      %v2476 = vpop.xlane.xlu0 %2475
      %v2477 = vadd.f32 %v2453, %v2455
      %2478 = vadd.xlane.f32.xlu0 %v2477
      %v2479 = vpop.xlane.xlu0 %2478
      %v2480 = vadd.f32 %v2459, %v2461
      %2481 = vadd.xlane.f32.xlu0 %v2480
      %v2482 = vpop.xlane.xlu0 %2481
      %v2483 = vmul.f32 %v2473, 0.00390625
      %v2484 = vmul.f32 %v2476, 0.00390625
      %v2485 = vmul.f32 %v2479, 0.00390625
      %v2486 = vmul.f32 %v2482, 0.00390625
      %v2487 = vsub.f32 %v2441, %v2483
      %v2488 = vsub.f32 %v2443, %v2483
      %v2489 = vsub.f32 %v2447, %v2484
      %v2490 = vsub.f32 %v2449, %v2484
      %v2491 = vsub.f32 %v2453, %v2485
      %v2492 = vsub.f32 %v2455, %v2485
      %v2493 = vsub.f32 %v2459, %v2486
      %v2494 = vsub.f32 %v2461, %v2486
      %v2495 = vmul.f32 %v2487, %v2487
      %v2496 = vmul.f32 %v2488, %v2488
      %v2497 = vmul.f32 %v2489, %v2489
      %v2498 = vmul.f32 %v2490, %v2490
      %v2499 = vmul.f32 %v2491, %v2491
      %v2500 = vmul.f32 %v2492, %v2492
      %v2501 = vmul.f32 %v2493, %v2493
      %v2502 = vmul.f32 %v2494, %v2494
      %v2503 = vadd.f32 %v2495, %v2496
      %2504 = vadd.xlane.f32.xlu0 %v2503
      %v2505 = vpop.xlane.xlu0 %2504
      %v2506 = vadd.f32 %v2497, %v2498
      %2507 = vadd.xlane.f32.xlu0 %v2506
      %v2508 = vpop.xlane.xlu0 %2507
      %v2509 = vadd.f32 %v2499, %v2500
      %2510 = vadd.xlane.f32.xlu0 %v2509
      %v2511 = vpop.xlane.xlu0 %2510
      %v2512 = vadd.f32 %v2501, %v2502
      %2513 = vadd.xlane.f32.xlu0 %v2512
      %v2514 = vpop.xlane.xlu0 %2513
      %vm2515 = vcmask 7168
      %v2516 = vsel %vm2515, %v2473, %v2505
      %v2517 = vsel %vm2515, %v2476, %v2508
      %v2518 = vsel %vm2515, %v2479, %v2511
      %v2519 = vsel %vm2515, %v2482, %v2514
      %vm2520 = vcmask 15360
      %2521 = vst.msk [vmem:[%s230] sm:$0xff] %vm2520, %v2516
      %2522 = vst.msk [vmem:[%s230 + $0x8] sm:$0xff] %vm2520, %v2517
      %2523 = vst.msk [vmem:[%s230 + $0x10] sm:$0xff] %vm2520, %v2518
      %2524 = vst.msk [vmem:[%s230 + $0x18] sm:$0xff] %vm2520, %v2519
      %s2525 = smul.u32 2, %s20
      %p2526 = scmp.lt.s32.totalorder %s19, 1
      %s2527 = scalar_select %p2526, %s19, 1
      %p2528 = scmp.lt.s32.totalorder %s2525, 1
      %s2529 = scalar_select %p2528, %s2525, 1
      %s2530 = smul.addr %s2527, 8
      %s2531 = sadd.s32 %s2529, %s2530
      %s2532 = smul.addr %s2531, 8
      %s2533 = scalar_lea.vmem %s2, %s2532
      %p2534 = scmp.lt.s32.totalorder %s19, 1
      %s2535 = scalar_select %p2534, %s19, 1
      %p2536 = scmp.lt.s32.totalorder %s20, 0
      %s2537 = scalar_select %p2536, %s20, 0
      %s2538 = smul.addr %s2537, 4
      %s2539 = smul.addr %s2535, 4
      %s2540 = sadd.s32 %s2538, %s2539
      %s2541 = smul.addr %s2540, 8
      %s2542 = scalar_lea.vmem %s3, %s2541
      // Predicated region
      $region29: #{decoder_block.1} parent=27 // pred_check
        %p2543 = pneg %p96
      $region30: #{decoder_block.1} parent=27 // pred_check_branch
        %2545 = sbr.rel (%p2543) target = $region32
      $region31: #{decoder_block.1} parent=27 // pred_region
        %s2546 = smul.u32 2, %s20
      $region32: #{decoder_block.1} parent=27 // pred_fallthru
        _
      // Predicated region
      $region33: #{decoder_block.1} parent=27 // pred_check
        %p2547 = pneg %p124
      $region34: #{decoder_block.1} parent=27 // pred_check_branch
        %2549 = sbr.rel (%p2547) target = $region36
      $region35: #{decoder_block.1} parent=27 // pred_region
        _
      $region36: #{decoder_block.1} parent=27 // pred_fallthru
        _
    $region28: #{decoder_block.1} parent=5 // pred_fallthru
      _
    %p2550 = scmp.le.s32.totalorder 2, %s10
    // Predicated region
    $region37: #{decoder_block.1} parent=5 // pred_check
      %p2551 = pneg %p2550
    $region38: #{decoder_block.1} parent=5 // pred_check_branch
      %2553 = sbr.rel (%p2551) target = $region40
    $region39: #{decoder_block.1} parent=5 // pred_region
      %s2554 = ssub.s32 %s10, 2
      // Predicated region
      $region41: #{decoder_block.1} parent=39 // pred_check
        %p2555 = pneg %p102
      $region42: #{decoder_block.1} parent=39 // pred_check_branch
        %2557 = sbr.rel (%p2555) target = $region44
      $region43: #{decoder_block.1} parent=39 // pred_region
        %s2558 = smul.u32 2, %s22
        %p2559 = scmp.lt.s32.totalorder %s21, 1
        %s2560 = scalar_select %p2559, %s21, 1
        %p2561 = scmp.lt.s32.totalorder %s2558, 1
        %s2562 = scalar_select %p2561, %s2558, 1
        %s2563 = smul.addr %s2560, 8
        %s2564 = sadd.s32 %s2562, %s2563
        %s2565 = smul.addr %s2564, 8
        %s2566 = scalar_lea.vmem %s2, %s2565
      $region44: #{decoder_block.1} parent=39 // pred_fallthru
        _
      // Predicated region
      $region45: #{decoder_block.1} parent=39 // pred_check
        %p2567 = pneg %p130
      $region46: #{decoder_block.1} parent=39 // pred_check_branch
        %2569 = sbr.rel (%p2567) target = $region48
      $region47: #{decoder_block.1} parent=39 // pred_region
        %p2570 = scmp.lt.s32.totalorder %s21, 1
        %s2571 = scalar_select %p2570, %s21, 1
        %p2572 = scmp.lt.s32.totalorder %s22, 0
        %s2573 = scalar_select %p2572, %s22, 0
        %s2574 = smul.addr %s2573, 4
        %s2575 = smul.addr %s2571, 4
        %s2576 = sadd.s32 %s2574, %s2575
        %s2577 = smul.addr %s2576, 8
        %s2578 = scalar_lea.vmem %s3, %s2577
      $region48: #{decoder_block.1} parent=39 // pred_fallthru
        _
    $region40: #{decoder_block.1} parent=5 // pred_fallthru
      _
  $region6: #{decoder_block.1} parent=0 // loop_footer
    %s14 = sadd.s32 1, %s10
  $region7: #{decoder_block.1} parent=0 // loop_footer_branch
    %9 = sbr.rel target = $region3
  $region8: #{decoder_block.1} parent=0 // loop_exit
    _

</llo_original>
